<compile_context>
chip_gen: v6e
topology: v6e:2x2x1
jax: 0.10.0
libtpu: 0.0.40
codegen_flags: <defaults>
</compile_context>

<pallas_src>
import jax
import jax.numpy as jnp
from jax.experimental import pallas as pl
from jax.experimental.pallas import tpu as pltpu


def _round_up(v, m):
    return (v + m - 1) // m * m


# ------------------------- adjacency preprocessing ---------------------------
def dir_norm(adj):
    """get_norm_adj(adj, norm='dir') = D_out^{-1/2} A D_in^{-1/2}."""
    out_deg = adj.sum(axis=1)
    in_deg = adj.sum(axis=0)
    out_inv = jnp.where(out_deg > 0, out_deg ** -0.5, 0.0)
    in_inv = jnp.where(in_deg > 0, in_deg ** -0.5, 0.0)
    return out_inv[:, None] * adj * in_inv[None, :]


def precompute_dirgcn(adj, alpha1, alpha2, beta1, *,
                      compute_dtype=jnp.bfloat16, row_align=512):
    """Dense equivalent of the torch module's cached normalized adjacencies.

    Folds the (static) alpha/beta mixing into two matrices and packs them:
        A_p = b1*a1*adj_norm       + (1-b1)*a2*adj_2nd_out_norm   (lin_src_to_dst path)
        A_q = b1*(1-a1)*adj_t_norm + (1-b1)*(1-a2)*adj_2nd_in_norm (lin_dst_to_src path)
        A_pack = [A_p | A_q]   -- already padded to (n_pad, 2*n_pad) and cast to the
                                  streaming dtype (no per-forward N^2 pad/convert).
    Returns (a_pack, coef_p, coef_q) with coef_* the summed bias coefficients.
    """
    n = adj.shape[0]
    eye = jnp.eye(n, dtype=adj.dtype)
    adj_t = adj.T
    adj_sq = (adj @ adj) * (1.0 - eye)          # set_diag(0)
    adj_t_sq = (adj_t @ adj_t) * (1.0 - eye)    # set_diag(0)
    a1 = dir_norm(adj)        # adj_norm                  (W1 / src_to_dst path)
    a2 = dir_norm(adj_t)      # adj_t_norm                (W2 / dst_to_src path)
    a3 = dir_norm(adj_t_sq)   # adj_second_order_out_norm (W1 path)
    a4 = dir_norm(adj_sq)     # adj_second_order_in_norm  (W2 path)
    c1 = beta1 * alpha1
    c2 = beta1 * (1.0 - alpha1)
    c3 = (1.0 - beta1) * alpha2
    c4 = (1.0 - beta1) * (1.0 - alpha2)
    a_p = c1 * a1 + c3 * a3   # multiplies lin_src_to_dst projection
    a_q = c2 * a2 + c4 * a4   # multiplies lin_dst_to_src projection

    n_pad = _round_up(n, row_align)
    pad = lambda a: jnp.pad(a, ((0, n_pad - n), (0, n_pad - n)))
    # TODO(synk): stream A in 8-bit (int8 on v5e/v6e, fp8 e4m3 on v7x) with per-row
    # scales applied in the f32 epilogue to halve the dominant HBM traffic.
    a_pack = jnp.concatenate([pad(a_p), pad(a_q)], axis=1).astype(compute_dtype)
    return a_pack, c1 + c3, c2 + c4


# ----------------------------- Pallas forward --------------------------------
def dirgcn_forward(a_pack, x, w1, b1, w2, b2, coef_p, coef_q):
    """Fused hot path: out = [A_p|A_q] @ [X W1^T ; X W2^T] + (coef_p*b1 + coef_q*b2)."""
    n, _ = x.shape
    o = w1.shape[0]
    n_pad, k_pad = a_pack.shape
    assert k_pad == 2 * n_pad, "a_pack must be the packed [A_p | A_q] cache"
    compute_dtype = a_pack.dtype
    itemsize = jnp.dtype(compute_dtype).itemsize
    o_pad = _round_up(o, 128)                       # lane-dense output stores

    # Tiny (N, O) projections computed once per call in f32; they become the
    # stationary (VMEM-resident) MXU operand inside the kernel.
    xw1 = (x @ w1.T).astype(jnp.float32)
    xw2 = (x @ w2.T).astype(jnp.float32)
    pad_xw = lambda a: jnp.pad(a, ((0, n_pad - n), (0, o_pad - o)))
    xw_pack = jnp.concatenate([pad_xw(xw1), pad_xw(xw2)], axis=0).astype(compute_dtype)
    b_comb = (coef_p * b1 + coef_q * b2).astype(jnp.float32).reshape(1, -1)
    b_p = jnp.pad(b_comb, ((0, 0), (0, o_pad - o)))

    # --- generation-aware tiling / VMEM budget --------------------------------
    try:
        vmem_cap = int(getattr(pltpu.get_tpu_info(), "vmem_capacity_bytes", 64 << 20))
    except Exception:                               # defensive fallback (v7x-sized)
        vmem_cap = 64 << 20
    budget = int(vmem_cap * 0.8)                    # ~102 MiB on 128 MiB parts, ~51 MiB on v7x

    kind = jax.devices()[0].device_kind.lower()
    is_v5e = ("v5e" in kind) or ("v5 lite" in kind) or ("v5lite" in kind)
    a_depth = 3 if is_v5e else 2                    # deeper A buffering on the low-BW part

    tk = next(c for c in (2048, 1024, 512, 256, 128) if k_pad % c == 0)
    xw_bytes = k_pad * o_pad * itemsize             # resident, single copy
    bias_bytes = 8 * 128 * 4

    def vmem_need(tm_, depth):
        return (xw_bytes + bias_bytes
                + depth * tm_ * tk * itemsize       # streamed A stripes
                + 2 * tm_ * o_pad * 4               # double-buffered output blocks
                + tm_ * o_pad * 4)                  # f32 accumulator scratch

    tm_candidates = [c for c in (4096, 2048, 1024, 512, 256, 128, 64, 32, 16, 8)
                     if n_pad % c == 0]
    tm = next((c for c in tm_candidates if vmem_need(c, a_depth) <= budget),
              tm_candidates[-1])
    if vmem_need(tm, a_depth) > budget and a_depth > 2:
        a_depth = 2                                 # drop extra buffering before shrinking tiles
        tm = next((c for c in tm_candidates if vmem_need(c, a_depth) <= budget),
                  tm_candidates[-1])
    # Keep both v7x TensorCores busy: at least 2 row iterations when possible.
    if n_pad // tm < 2:
        for c in tm_candidates:
            if c < tm and n_pad // c >= 2:
                tm = c
                break
    grid = (n_pad // tm, k_pad // tk)
    # TODO(synk): if the resident packed projection (k_pad x o_pad) itself outgrows the
    # VMEM budget (ultra-large graphs), switch it to a K-tiled streamed BlockSpec.

    need_bytes = vmem_need(tm, a_depth)
    vmem_limit = int(min(max(int(need_bytes * 1.4) + (4 << 20), 32 << 20),
                         int(vmem_cap * 0.9)))

    def kernel(a_ref, xw_ref, b_ref, o_ref, acc_ref):
        k = pl.program_id(1)

        @pl.when(k == 0)
        def _init():
            acc_ref[...] = jnp.zeros_like(acc_ref)

        start = pl.multiple_of(k * tk, tk)
        acc_ref[...] += jnp.dot(a_ref[...], xw_ref[pl.ds(start, tk), :],
                                preferred_element_type=jnp.float32)

        @pl.when(k == pl.num_programs(1) - 1)
        def _finalize():
            # f32 epilogue (bias add) + lane-dense store; padded rows are sliced off
            # by the caller.
            o_ref[...] = (acc_ref[...] + b_ref[...]).astype(o_ref.dtype)

    a_idx = lambda i, k: (i, k)
    if a_depth != 2:
        try:   # 3-deep A stream on v5e only; fall back silently if unsupported.
            a_spec = pl.BlockSpec((tm, tk), a_idx, pipeline_mode=pl.Buffered(a_depth))
        except TypeError:
            a_spec = pl.BlockSpec((tm, tk), a_idx)
    else:
        a_spec = pl.BlockSpec((tm, tk), a_idx)

    # Whole-array, single-buffered VMEM residents (DMA'd once, not pipelined).
    xw_spec = pl.BlockSpec(memory_space=pltpu.MemorySpace.VMEM)
    b_spec = pl.BlockSpec(memory_space=pltpu.MemorySpace.VMEM)

    out = pl.pallas_call(
        kernel,
        out_shape=jax.ShapeDtypeStruct((n_pad, o_pad), jnp.float32),
        grid_spec=pltpu.PrefetchScalarGridSpec(
            num_scalar_prefetch=0,
            grid=grid,
            in_specs=[
                a_spec,     # [A_p | A_q] stripe, streamed (tm, tk)
                xw_spec,    # packed [XW1 ; XW2], VMEM-resident
                b_spec,     # combined bias
            ],
            out_specs=pl.BlockSpec((tm, o_pad), lambda i, k: (i, 0)),
            scratch_shapes=[pltpu.VMEM((tm, o_pad), jnp.float32)],
        ),
        compiler_params=pltpu.CompilerParams(
            dimension_semantics=("parallel", "arbitrary"),
            vmem_limit_bytes=vmem_limit,
        ),
    )(a_pack, xw_pack, b_p)
    return out[:n, :o]


# ---------------------------------- main --------------------------------------
if __name__ == "__main__":
    N = 64          # num_nodes
    F_IN = 32       # input_dim
    F_OUT = 32      # output_dim
    ALPHA1, ALPHA2, BETA1 = 0.5, 0.3, 0.7

    key = jax.random.PRNGKey(0)
    k_adj, k_x, k_w1, k_b1, k_w2, k_b2 = jax.random.split(key, 6)

    # deterministic synthetic directed graph (dense 0/1 adjacency, no self loops)
    adj = jax.random.bernoulli(k_adj, p=0.1, shape=(N, N)).astype(jnp.float32)
    adj = adj * (1.0 - jnp.eye(N, dtype=jnp.float32))

    x = jax.random.normal(k_x, (N, F_IN), dtype=jnp.float32)

    # torch nn.Linear(input_dim, output_dim): weight (out, in), bias (out,)
    bound = 1.0 / (F_IN ** 0.5)
    w1 = jax.random.uniform(k_w1, (F_OUT, F_IN), minval=-bound, maxval=bound)
    b1 = jax.random.uniform(k_b1, (F_OUT,), minval=-bound, maxval=bound)
    w2 = jax.random.uniform(k_w2, (F_OUT, F_IN), minval=-bound, maxval=bound)
    b2 = jax.random.uniform(k_b2, (F_OUT,), minval=-bound, maxval=bound)

    # Static cache: built once, already padded/packed/cast for the kernel.
    a_pack, coef_p, coef_q = precompute_dirgcn(adj, ALPHA1, ALPHA2, BETA1)
    a_pack = jax.block_until_ready(a_pack)

    out = dirgcn_forward(a_pack, x, w1, b1, w2, b2, coef_p, coef_q)
    out = jax.block_until_ready(out)

    # pure-JAX f32 reference matching the torch forward expression exactly
    eye = jnp.eye(N, dtype=jnp.float32)
    a1r = dir_norm(adj)
    a2r = dir_norm(adj.T)
    a3r = dir_norm((adj.T @ adj.T) * (1.0 - eye))
    a4r = dir_norm((adj @ adj) * (1.0 - eye))
    y1 = a1r @ x @ w1.T + b1
    y2 = a2r @ x @ w2.T + b2
    y3 = a3r @ x @ w1.T + b1
    y4 = a4r @ x @ w2.T + b2
    ref = (BETA1 * (ALPHA1 * y1 + (1 - ALPHA1) * y2)
           + (1 - BETA1) * (ALPHA2 * y3 + (1 - ALPHA2) * y4))

    assert out.shape == (N, F_OUT) and out.dtype == jnp.float32
    # Tolerance loosened for bf16 adjacencies/projections (f32 MXU accumulation).
    assert jnp.allclose(out, ref, atol=3e-2, rtol=3e-2), \
        float(jnp.max(jnp.abs(out - ref)))
    print("KERNEL_OK")
</pallas_src>

<mosaic_0001>
module attributes {stable_mosaic.version = 11 : i64} {
  func.func @kernel(%arg0: i32, %arg1: i32, %arg2: memref<256x1024xbf16, #tpu.memory_space<vmem>>, %arg3: memref<1024x128xbf16, #tpu.memory_space<vmem>>, %arg4: memref<1x128xf32, #tpu.memory_space<vmem>>, %arg5: memref<256x128xf32, #tpu.memory_space<vmem>>, %arg6: memref<256x128xf32, #tpu.memory_space<vmem>>) attributes {dimension_semantics = [#tpu.dimension_semantics<parallel>, #tpu.dimension_semantics<arbitrary>], iteration_bounds = array<i64: 2, 1>, scalar_prefetch = 0 : i64, scratch_operands = 1 : i64, tpu.core_type = #tpu.core_type<tc>, window_params = [{transform_indices = @transform_0, window_bounds = array<i64: 256, 1024>}, {pipeline_mode = #tpu.pipeline_mode<synchronous>, transform_indices = @transform_1, window_bounds = array<i64: 1024, 128>}, {pipeline_mode = #tpu.pipeline_mode<synchronous>, transform_indices = @transform_2, window_bounds = array<i64: 1, 128>}, {transform_indices = @transform_3, window_bounds = array<i64: 256, 128>}]} {
    %c0_i32 = arith.constant 0 : i32
    %0 = arith.cmpi eq, %arg1, %c0_i32 : i32
    %1 = arith.extui %0 : i1 to i32
    %c0_i32_0 = arith.constant 0 : i32
    %2 = arith.cmpi ne, %1, %c0_i32_0 : i32
    scf.if %2 {
      %cst_9 = arith.constant 0.000000e+00 : f32
      %15 = vector.broadcast %cst_9 : f32 to vector<256x128xf32>
      %c0_10 = arith.constant 0 : index
      %c0_11 = arith.constant 0 : index
      %16 = vector.load %arg6[%c0_10, %c0_11] : memref<256x128xf32, #tpu.memory_space<vmem>>, vector<256x128xf32>
      tpu.vector_store %arg6[%c0_10, %c0_11], %15 {strides = array<i32>} : memref<256x128xf32, #tpu.memory_space<vmem>>, vector<256x128xf32>,
    } else {
    }
    %c1024_i32 = arith.constant 1024 : i32
    %3 = arith.muli %arg1, %c1024_i32 : i32
    %4 = tpu.assume_multiple %3, 1024 : i32
    %c0 = arith.constant 0 : index
    %c0_1 = arith.constant 0 : index
    %5 = vector.load %arg6[%c0, %c0_1] : memref<256x128xf32, #tpu.memory_space<vmem>>, vector<256x128xf32>
    %c0_2 = arith.constant 0 : index
    %c0_3 = arith.constant 0 : index
    %6 = vector.load %arg2[%c0_2, %c0_3] : memref<256x1024xbf16, #tpu.memory_space<vmem>>, vector<256x1024xbf16>
    %7 = arith.index_cast %4 : i32 to index
    %c0_4 = arith.constant 0 : index
    %8 = vector.load %arg3[%7, %c0_4] : memref<1024x128xbf16, #tpu.memory_space<vmem>>, vector<1024x128xbf16>
    %cst = arith.constant dense<0.000000e+00> : vector<256x128xf32>
    %9 = tpu.matmul %6, %8, %cst {dimension_numbers = #tpu.dot_dimension_numbers<[1], [0], [0], [1], [0, 0, 1, 1], [], []>} : vector<256x1024xbf16>, vector<1024x128xbf16>, vector<256x128xf32> -> vector<256x128xf32>
    %10 = arith.addf %5, %9 : vector<256x128xf32>
    %c0_5 = arith.constant 0 : index
    %c0_6 = arith.constant 0 : index
    %11 = vector.load %arg6[%c0_5, %c0_6] : memref<256x128xf32, #tpu.memory_space<vmem>>, vector<256x128xf32>
    tpu.vector_store %arg6[%c0_5, %c0_6], %10 {strides = array<i32>} : memref<256x128xf32, #tpu.memory_space<vmem>>, vector<256x128xf32>,
    %c0_i32_7 = arith.constant 0 : i32
    %12 = arith.cmpi eq, %arg1, %c0_i32_7 : i32
    %13 = arith.extui %12 : i1 to i32
    %c0_i32_8 = arith.constant 0 : i32
    %14 = arith.cmpi ne, %13, %c0_i32_8 : i32
    scf.if %14 {
      %c0_9 = arith.constant 0 : index
      %c0_10 = arith.constant 0 : index
      %15 = vector.load %arg6[%c0_9, %c0_10] : memref<256x128xf32, #tpu.memory_space<vmem>>, vector<256x128xf32>
      %c0_11 = arith.constant 0 : index
      %c0_12 = arith.constant 0 : index
      %16 = vector.load %arg4[%c0_11, %c0_12] : memref<1x128xf32, #tpu.memory_space<vmem>>, vector<1x128xf32>
      %17 = vector.broadcast %16 : vector<1x128xf32> to vector<256x128xf32>
      %18 = arith.addf %15, %17 : vector<256x128xf32>
      %c0_13 = arith.constant 0 : index
      %c0_14 = arith.constant 0 : index
      %19 = vector.load %arg5[%c0_13, %c0_14] : memref<256x128xf32, #tpu.memory_space<vmem>>, vector<256x128xf32>
      tpu.vector_store %arg5[%c0_13, %c0_14], %18 {strides = array<i32>} : memref<256x128xf32, #tpu.memory_space<vmem>>, vector<256x128xf32>,
    } else {
    }
    return
  }
  func.func @transform_0(%arg0: i32, %arg1: i32) -> (i32, i32) {
    %c0_i32 = arith.constant 0 : i32
    return %arg0, %arg1 : i32, i32
  }
  func.func @transform_1(%arg0: i32, %arg1: i32) -> (i32, i32) {
    %c0_i32 = arith.constant 0 : i32
    %c0_i32_0 = arith.constant 0 : i32
    %c0_i32_1 = arith.constant 0 : i32
    return %c0_i32, %c0_i32_0 : i32, i32
  }
  func.func @transform_2(%arg0: i32, %arg1: i32) -> (i32, i32) {
    %c0_i32 = arith.constant 0 : i32
    %c0_i32_0 = arith.constant 0 : i32
    %c0_i32_1 = arith.constant 0 : i32
    return %c0_i32, %c0_i32_0 : i32, i32
  }
  func.func @transform_3(%arg0: i32, %arg1: i32) -> (i32, i32) {
    %c0_i32 = arith.constant 0 : i32
    %c0_i32_0 = arith.constant 0 : i32
    return %arg0, %c0_i32 : i32, i32
  }
}

</mosaic_0001>

<llo_original>
// kernel: tpu_custom_call.1
$region0: #{tpu_custom_call.1}
  #allocation0 [shape = 'u32[]', space=smem, size = 0x4, offset = 0x4, fixed_abs, tag = 'smem constant byte address 0x4 - core index']
  #allocation1 [shape = 'u32[144,128]{1,0:T(1,128)}', space=vmem, size = 0x12000, scoped, tag = 'internal scratch']
  #allocation2 [shape = 'f32[256,128]{1,0:T(8,128)}', space=vmem, size = 0x20000, scoped, tag = 'scratch operand']
  %s0 = inlined_call_operand.hbm [shape: bf16[512,1024], index: 0, kind: input, shape index: {}]
  %s1 = inlined_call_operand.hbm [shape: bf16[1024,128], index: 1, kind: input, shape index: {}]
  %s2 = inlined_call_operand.vmem [shape: f32[1,128], index: 2, kind: input, shape index: {}]
  %s3 = inlined_call_operand.hbm [shape: f32[512,128], index: 3, kind: output, shape index: {}]
  %s4 = sld [smem:[#allocation0]]
  $region61: #{tpu_custom_call.1} parent=0
    _
  %s6 = ssub.s32 1, %s4
  %s7 = scalar_select 0, %s6, %s4
  $region1: #{tpu_custom_call.1} parent=0
    #allocation3 [shape = 'u8[1048576]{0}', space=vmem, size = 0x100000, scoped, tag = 'input window, operand 0']
    #allocation4 [shape = 's32[2]{0}', space=sflag, size = 0x8, scoped, tag = 'scoped memory for tpu_custom_call.1']
    #allocation5 [shape = 's32[2]{0}', space=sflag, size = 0x8, scoped, tag = 'scoped memory for tpu_custom_call.1']
    #allocation6 [shape = 'u8[262144]{0}', space=vmem, size = 0x40000, scoped, tag = 'input window, operand 1, single buffered']
    #allocation7 [shape = 's32[1]{0}', space=sflag, size = 0x4, scoped, tag = 'scoped memory for tpu_custom_call.1']
    #allocation8 [shape = 'u8[262144]{0}', space=vmem, size = 0x40000, scoped, tag = 'output window, operand 0']
    %8 = vsyncpa [#allocation4], 0
    %s9 = scalar_lea.sflag [#allocation4], 1
    %10 = vsyncpa %s9, 0
    %11 = vsyncpa [#allocation7], 0
    %12 = vsyncpa [#allocation5], 0
    %s13 = scalar_lea.sflag [#allocation5], 1
    %14 = vsyncpa %s13, 0
    loop: start=0, step=1, limit=4
    $region2: #{tpu_custom_call.1} parent=1 // loop_pre_header
      _
    $region3: #{tpu_custom_call.1} parent=1 // loop_header
      %s16 = sphi 0, %s20
      %p17 = scmp.ge.s32.totalorder %s16, 4
      %s23 = sphi 0, %s35
      %s24 = sphi 0, %s31
      %s25 = sphi 0, %s23
      %s26 = sphi 0, %s24
      %s27 = sphi 0, %s25
      %s28 = sphi 0, %s26
      %s40 = sphi 0, %s42
      %s43 = sphi 0, %s40
      %s44 = sphi 0, %s43
      %s60 = sphi 0, %s44
      %s64 = sphi 0, %s64
      %s66 = sphi 0, %s64
      %s67 = sphi 0, %s66
      %s81 = sphi 0, %s67
      %s85 = sphi 0, %s85
      %s87 = sphi 0, %s85
      %s88 = sphi 0, %s87
      %s102 = sphi 0, %s88
      %s108 = sphi 0, %s110
      %s111 = sphi 0, %s108
      %s112 = sphi 0, %s111
      %s128 = sphi 0, %s112
    $region4: #{tpu_custom_call.1} parent=1 // loop_header_branch
      %19 = sbr.rel (%p17) target = $region8
    $region5: #{tpu_custom_call.1} parent=1 // loop_body
      %s21 = ssub.s32 %s16, 1
      %s22 = ssub.s32 %s16, 2
      %s29 = sadd.s32 1, %s24
      %p30 = scmp.ge.s32.totalorder %s29, 1
      %s31 = scalar_select %p30, 0, %s29
      %s32 = sadd.s32 1, %s23
      %s33 = scalar_select %p30, %s32, %s23
      %p34 = scmp.ge.s32.totalorder %s33, 2
      %s35 = scalar_select %p34, 0, %s33
      %s36 = ssub.s32 %s23, %s35
      %s37 = ssub.s32 %s24, %s31
      %s38 = sor.u32 %s36, %s37
      %p39 = scmp.eq.s32.totalorder %s38, 0
      %s41 = sadd.s32 %s40, 1
      %s42 = scalar_select %p39, %s40, %s41
      %p45 = pneg %p39
      %p46 = scmp.eq.s32.totalorder %s16, 1
      %p47 = por %p45, %p46
      %p48 = scmp.ne.s32.totalorder %s40, %s43
      %p49 = scmp.eq.s32.totalorder %s16, 0
      %p50 = por %p48, %p49
      %p51 = scmp.ne.s32.totalorder %s40, %s43
      %p52 = scmp.eq.s32.totalorder %s21, 1
      %p53 = por %p51, %p52
      %p54 = scmp.ne.s32.totalorder %s43, %s44
      %p55 = scmp.eq.s32.totalorder %s21, 0
      %p56 = por %p54, %p55
      %p57 = scmp.ne.s32.totalorder %s43, %s44
      %p58 = scmp.eq.s32.totalorder %s22, 1
      %p59 = por %p57, %p58
      %p61 = scmp.ne.s32.totalorder %s44, %s60
      %p62 = scmp.eq.s32.totalorder %s22, 0
      %p63 = por %p61, %p62
      %s65 = sadd.s32 %s64, 1
      %p68 = scmp.eq.s32.totalorder %s16, 1
      %p69 = scmp.ne.s32.totalorder %s64, %s66
      %p70 = scmp.eq.s32.totalorder %s16, 0
      %p71 = por %p69, %p70
      %p72 = scmp.ne.s32.totalorder %s64, %s66
      %p73 = scmp.eq.s32.totalorder %s21, 1
      %p74 = por %p72, %p73
      %p75 = scmp.ne.s32.totalorder %s66, %s67
      %p76 = scmp.eq.s32.totalorder %s21, 0
      %p77 = por %p75, %p76
      %p78 = scmp.ne.s32.totalorder %s66, %s67
      %p79 = scmp.eq.s32.totalorder %s22, 1
      %p80 = por %p78, %p79
      %p82 = scmp.ne.s32.totalorder %s67, %s81
      %p83 = scmp.eq.s32.totalorder %s22, 0
      %p84 = por %p82, %p83
      %s86 = sadd.s32 %s85, 1
      %p89 = scmp.eq.s32.totalorder %s16, 1
      %p90 = scmp.ne.s32.totalorder %s85, %s87
      %p91 = scmp.eq.s32.totalorder %s16, 0
      %p92 = por %p90, %p91
      %p93 = scmp.ne.s32.totalorder %s85, %s87
      %p94 = scmp.eq.s32.totalorder %s21, 1
      %p95 = por %p93, %p94
      %p96 = scmp.ne.s32.totalorder %s87, %s88
      %p97 = scmp.eq.s32.totalorder %s21, 0
      %p98 = por %p96, %p97
      %p99 = scmp.ne.s32.totalorder %s87, %s88
      %p100 = scmp.eq.s32.totalorder %s22, 1
      %p101 = por %p99, %p100
      %p103 = scmp.ne.s32.totalorder %s88, %s102
      %p104 = scmp.eq.s32.totalorder %s22, 0
      %p105 = por %p103, %p104
      %s106 = ssub.s32 %s23, %s35
      %p107 = scmp.eq.s32.totalorder %s106, 0
      %s109 = sadd.s32 %s108, 1
      %s110 = scalar_select %p107, %s108, %s109
      %p113 = pneg %p107
      %p114 = scmp.eq.s32.totalorder %s16, 1
      %p115 = por %p113, %p114
      %p116 = scmp.ne.s32.totalorder %s108, %s111
      %p117 = scmp.eq.s32.totalorder %s16, 0
      %p118 = por %p116, %p117
      %p119 = scmp.ne.s32.totalorder %s108, %s111
      %p120 = scmp.eq.s32.totalorder %s21, 1
      %p121 = por %p119, %p120
      %p122 = scmp.ne.s32.totalorder %s111, %s112
      %p123 = scmp.eq.s32.totalorder %s21, 0
      %p124 = por %p122, %p123
      %p125 = scmp.ne.s32.totalorder %s111, %s112
      %p126 = scmp.eq.s32.totalorder %s22, 1
      %p127 = por %p125, %p126
      %p129 = scmp.ne.s32.totalorder %s112, %s128
      %p130 = scmp.eq.s32.totalorder %s22, 0
      %p131 = por %p129, %p130
      %p132 = scmp.le.s32.totalorder 1, %s16
      %p133 = scmp.lt.s32.totalorder %s16, 3
      %p134 = pnand %p132, %p133
      %p135 = pneg %p134
      // Predicated region
      $region9: #{tpu_custom_call.1} parent=5 // pred_check
        _
      $region10: #{tpu_custom_call.1} parent=5 // pred_check_branch
        %137 = sbr.rel (%p134) target = $region12
      $region11: #{tpu_custom_call.1} parent=5 // pred_region
        %s138 = ssub.s32 %s16, 1
        // Predicated region
        $region13: #{tpu_custom_call.1} parent=11 // pred_check
          %p139 = pneg %p77
        $region14: #{tpu_custom_call.1} parent=11 // pred_check_branch
          %141 = sbr.rel (%p139) target = $region16
        $region15: #{tpu_custom_call.1} parent=11 // pred_region
          %s143 = ssub.s32 8192, 8192
          %144 = vsyncadd [#allocation7], %s143
          %s145 = sshll.u32 [#allocation6], 4
          %s146 = int_to_ptr.vmem [resolvable:$true] %s145
          %151 = dma.hbm_to_vmem [thread:$0]  %s1, 8192, %s146, [#allocation7], 64, 64, 4
        $region16: #{tpu_custom_call.1} parent=11 // pred_fallthru
          _
        // Predicated region
        $region17: #{tpu_custom_call.1} parent=11 // pred_check
          %p152 = pneg %p98
        $region18: #{tpu_custom_call.1} parent=11 // pred_check_branch
          %154 = sbr.rel (%p152) target = $region20
        $region19: #{tpu_custom_call.1} parent=11 // pred_region
          _
        $region20: #{tpu_custom_call.1} parent=11 // pred_fallthru
          _
      $region12: #{tpu_custom_call.1} parent=5 // pred_fallthru
        _
      %p155 = scmp.lt.s32.totalorder %s16, 2
      // Predicated region
      $region21: #{tpu_custom_call.1} parent=5 // pred_check
        %p156 = pneg %p155
      $region22: #{tpu_custom_call.1} parent=5 // pred_check_branch
        %158 = sbr.rel (%p156) target = $region24
      $region23: #{tpu_custom_call.1} parent=5 // pred_region
        // Predicated region
        $region25: #{tpu_custom_call.1} parent=23 // pred_check
          %p159 = pneg %p50
        $region26: #{tpu_custom_call.1} parent=23 // pred_check_branch
          %161 = sbr.rel (%p159) target = $region28
        $region27: #{tpu_custom_call.1} parent=23 // pred_region
          %s162 = sand.u32 %s40, 1
          %s163 = scalar_lea.sflag [#allocation4], %s162
          %s164 = sand.u32 %s40, 1
          %s165 = smul.addr %s164, 1024
          %s166 = scalar_lea.vmem [#allocation3], %s165
          %s167 = smul.u32 32, %s23
          %s168 = smul.u32 8, %s24
          %s170 = ssub.s32 16384, 16384
          %171 = vsyncadd %s163, %s170
          %s172 = smul.addr %s167, 8
          %s173 = sadd.s32 %s168, %s172
          %s174 = smul.addr %s173, 64
          %s175 = scalar_lea.hbm %s0, %s174
          %s176 = sshll.u32 %s166, 4
          %s177 = int_to_ptr.vmem [resolvable:$true] %s176
          %182 = dma.hbm_to_vmem [thread:$0]  %s175, 16384, %s177, %s163, 512, 512, 32
        $region28: #{tpu_custom_call.1} parent=23 // pred_fallthru
          _
      $region24: #{tpu_custom_call.1} parent=5 // pred_fallthru
        _
      %p183 = scmp.le.s32.totalorder 1, %s16
      %p184 = scmp.lt.s32.totalorder %s16, 3
      %p185 = pnand %p183, %p184
      %p186 = pneg %p185
      // Predicated region
      $region29: #{tpu_custom_call.1} parent=5 // pred_check
        _
      $region30: #{tpu_custom_call.1} parent=5 // pred_check_branch
        %188 = sbr.rel (%p185) target = $region32
      $region31: #{tpu_custom_call.1} parent=5 // pred_region
        %s189 = ssub.s32 %s16, 1
        %s190 = sand.u32 %s43, 1
        %s191 = scalar_lea.sflag [#allocation4], %s190
        %s192 = sand.u32 %s43, 1
        %s193 = smul.addr %s192, 1024
        %s194 = scalar_lea.vmem [#allocation3], %s193
        // Predicated region
        $region33: #{tpu_custom_call.1} parent=31 // pred_check
          %p195 = pneg %p56
        $region34: #{tpu_custom_call.1} parent=31 // pred_check_branch
          %197 = sbr.rel (%p195) target = $region36
        $region35: #{tpu_custom_call.1} parent=31 // pred_region
          %198 = dma.done %s191, 16384
        $region36: #{tpu_custom_call.1} parent=31 // pred_fallthru
          _
        // Predicated region
        $region37: #{tpu_custom_call.1} parent=31 // pred_check
          %p199 = pneg %p77
        $region38: #{tpu_custom_call.1} parent=31 // pred_check_branch
          %201 = sbr.rel (%p199) target = $region40
        $region39: #{tpu_custom_call.1} parent=31 // pred_region
          %202 = dma.done [#allocation7], 8192
        $region40: #{tpu_custom_call.1} parent=31 // pred_fallthru
          _
        %s203 = sand.u32 %s43, 1
        %s204 = scalar_lea.sflag [#allocation4], %s203
        %s205 = sand.u32 %s43, 1
        %s206 = smul.addr %s205, 1024
        %s207 = scalar_lea.vmem [#allocation3], %s206
        %p208 = pneg %p56
        %p209 = pneg %p53
        %p210 = pneg %p77
        %p211 = pneg %p74
        %p212 = pneg %p98
        %p213 = pneg %p95
        %p214 = pneg %p124
        %p215 = pneg %p121
        %s216 = sand.u32 %s111, 1
        %s217 = scalar_lea.sflag [#allocation5], %s216
        %s218 = sand.u32 %s111, 1
        %s219 = smul.addr %s218, 256
        %s220 = scalar_lea.vmem [#allocation8], %s219
        %s221 = smul.u32 32, %s25
        %s222 = smul.u32 8, %s26
        %s223 = smul.u32 32, %s25
        %p225 = scmp.eq.s32.totalorder %s26, 0
        // Predicated region
        $region41: #{tpu_custom_call.1} parent=31 // pred_check
          %p226 = pneg %p225
        $region42: #{tpu_custom_call.1} parent=31 // pred_check_branch
          %228 = sbr.rel (%p226) target = $region44
        $region43: #{tpu_custom_call.1} parent=31 // pred_region
          %229 = vst [vmem:[#allocation2] sm:$0xff] 0.0
          %230 = vst [vmem:[#allocation2 + $0x8] sm:$0xff] 0.0
          %231 = vst [vmem:[#allocation2 + $0x10] sm:$0xff] 0.0
          %232 = vst [vmem:[#allocation2 + $0x18] sm:$0xff] 0.0
          %233 = vst [vmem:[#allocation2 + $0x20] sm:$0xff] 0.0
          %234 = vst [vmem:[#allocation2 + $0x28] sm:$0xff] 0.0
          %235 = vst [vmem:[#allocation2 + $0x30] sm:$0xff] 0.0
          %236 = vst [vmem:[#allocation2 + $0x38] sm:$0xff] 0.0
          %237 = vst [vmem:[#allocation2 + $0x40] sm:$0xff] 0.0
          %238 = vst [vmem:[#allocation2 + $0x48] sm:$0xff] 0.0
          %239 = vst [vmem:[#allocation2 + $0x50] sm:$0xff] 0.0
          %240 = vst [vmem:[#allocation2 + $0x58] sm:$0xff] 0.0
          %241 = vst [vmem:[#allocation2 + $0x60] sm:$0xff] 0.0
          %242 = vst [vmem:[#allocation2 + $0x68] sm:$0xff] 0.0
          %243 = vst [vmem:[#allocation2 + $0x70] sm:$0xff] 0.0
          %244 = vst [vmem:[#allocation2 + $0x78] sm:$0xff] 0.0
          %245 = vst [vmem:[#allocation2 + $0x80] sm:$0xff] 0.0
          %246 = vst [vmem:[#allocation2 + $0x88] sm:$0xff] 0.0
          %247 = vst [vmem:[#allocation2 + $0x90] sm:$0xff] 0.0
          %248 = vst [vmem:[#allocation2 + $0x98] sm:$0xff] 0.0
          %249 = vst [vmem:[#allocation2 + $0xa0] sm:$0xff] 0.0
          %250 = vst [vmem:[#allocation2 + $0xa8] sm:$0xff] 0.0
          %251 = vst [vmem:[#allocation2 + $0xb0] sm:$0xff] 0.0
          %252 = vst [vmem:[#allocation2 + $0xb8] sm:$0xff] 0.0
          %253 = vst [vmem:[#allocation2 + $0xc0] sm:$0xff] 0.0
          %254 = vst [vmem:[#allocation2 + $0xc8] sm:$0xff] 0.0
          %255 = vst [vmem:[#allocation2 + $0xd0] sm:$0xff] 0.0
          %256 = vst [vmem:[#allocation2 + $0xd8] sm:$0xff] 0.0
          %257 = vst [vmem:[#allocation2 + $0xe0] sm:$0xff] 0.0
          %258 = vst [vmem:[#allocation2 + $0xe8] sm:$0xff] 0.0
          %259 = vst [vmem:[#allocation2 + $0xf0] sm:$0xff] 0.0
          %260 = vst [vmem:[#allocation2 + $0xf8] sm:$0xff] 0.0
        $region44: #{tpu_custom_call.1} parent=31 // pred_fallthru
          _
        %s261 = smul.u32 %s26, 1024
        %v262 = vld [vmem:[#allocation2] sm:$0xff]
        %v263 = vld [vmem:[#allocation2 + $0x8] sm:$0xff]
        %v264 = vld [vmem:[#allocation2 + $0x10] sm:$0xff]
        %v265 = vld [vmem:[#allocation2 + $0x18] sm:$0xff]
        %v266 = vld [vmem:[#allocation2 + $0x20] sm:$0xff]
        %v267 = vld [vmem:[#allocation2 + $0x28] sm:$0xff]
        %v268 = vld [vmem:[#allocation2 + $0x30] sm:$0xff]
        %v269 = vld [vmem:[#allocation2 + $0x38] sm:$0xff]
        %v270 = vld [vmem:[#allocation2 + $0x40] sm:$0xff]
        %v271 = vld [vmem:[#allocation2 + $0x48] sm:$0xff]
        %v272 = vld [vmem:[#allocation2 + $0x50] sm:$0xff]
        %v273 = vld [vmem:[#allocation2 + $0x58] sm:$0xff]
        %v274 = vld [vmem:[#allocation2 + $0x60] sm:$0xff]
        %v275 = vld [vmem:[#allocation2 + $0x68] sm:$0xff]
        %v276 = vld [vmem:[#allocation2 + $0x70] sm:$0xff]
        %v277 = vld [vmem:[#allocation2 + $0x78] sm:$0xff]
        %v278 = vld [vmem:[#allocation2 + $0x80] sm:$0xff]
        %v279 = vld [vmem:[#allocation2 + $0x88] sm:$0xff]
        %v280 = vld [vmem:[#allocation2 + $0x90] sm:$0xff]
        %v281 = vld [vmem:[#allocation2 + $0x98] sm:$0xff]
        %v282 = vld [vmem:[#allocation2 + $0xa0] sm:$0xff]
        %v283 = vld [vmem:[#allocation2 + $0xa8] sm:$0xff]
        %v284 = vld [vmem:[#allocation2 + $0xb0] sm:$0xff]
        %v285 = vld [vmem:[#allocation2 + $0xb8] sm:$0xff]
        %v286 = vld [vmem:[#allocation2 + $0xc0] sm:$0xff]
        %v287 = vld [vmem:[#allocation2 + $0xc8] sm:$0xff]
        %v288 = vld [vmem:[#allocation2 + $0xd0] sm:$0xff]
        %v289 = vld [vmem:[#allocation2 + $0xd8] sm:$0xff]
        %v290 = vld [vmem:[#allocation2 + $0xe0] sm:$0xff]
        %v291 = vld [vmem:[#allocation2 + $0xe8] sm:$0xff]
        %v292 = vld [vmem:[#allocation2 + $0xf0] sm:$0xff]
        %v293 = vld [vmem:[#allocation2 + $0xf8] sm:$0xff]
        %v294 = vld [vmem:[%s194] sm:$0xff]
        %v295 = vld [vmem:[%s194 + $0x8] sm:$0xff]
        %v296 = vld [vmem:[%s194 + $0x10] sm:$0xff]
        %v297 = vld [vmem:[%s194 + $0x18] sm:$0xff]
        %v298 = vld [vmem:[%s194 + $0x20] sm:$0xff]
        %v299 = vld [vmem:[%s194 + $0x28] sm:$0xff]
        %v300 = vld [vmem:[%s194 + $0x30] sm:$0xff]
        %v301 = vld [vmem:[%s194 + $0x38] sm:$0xff]
        %v302 = vld [vmem:[%s194 + $0x40] sm:$0xff]
        %v303 = vld [vmem:[%s194 + $0x48] sm:$0xff]
        %v304 = vld [vmem:[%s194 + $0x50] sm:$0xff]
        %v305 = vld [vmem:[%s194 + $0x58] sm:$0xff]
        %v306 = vld [vmem:[%s194 + $0x60] sm:$0xff]
        %v307 = vld [vmem:[%s194 + $0x68] sm:$0xff]
        %v308 = vld [vmem:[%s194 + $0x70] sm:$0xff]
        %v309 = vld [vmem:[%s194 + $0x78] sm:$0xff]
        %v310 = vld [vmem:[%s194 + $0x80] sm:$0xff]
        %v311 = vld [vmem:[%s194 + $0x88] sm:$0xff]
        %v312 = vld [vmem:[%s194 + $0x90] sm:$0xff]
        %v313 = vld [vmem:[%s194 + $0x98] sm:$0xff]
        %v314 = vld [vmem:[%s194 + $0xa0] sm:$0xff]
        %v315 = vld [vmem:[%s194 + $0xa8] sm:$0xff]
        %v316 = vld [vmem:[%s194 + $0xb0] sm:$0xff]
        %v317 = vld [vmem:[%s194 + $0xb8] sm:$0xff]
        %v318 = vld [vmem:[%s194 + $0xc0] sm:$0xff]
        %v319 = vld [vmem:[%s194 + $0xc8] sm:$0xff]
        %v320 = vld [vmem:[%s194 + $0xd0] sm:$0xff]
        %v321 = vld [vmem:[%s194 + $0xd8] sm:$0xff]
        %v322 = vld [vmem:[%s194 + $0xe0] sm:$0xff]
        %v323 = vld [vmem:[%s194 + $0xe8] sm:$0xff]
        %v324 = vld [vmem:[%s194 + $0xf0] sm:$0xff]
        %v325 = vld [vmem:[%s194 + $0xf8] sm:$0xff]
        %v326 = vld [vmem:[%s194 + $0x100] sm:$0xff]
        %v327 = vld [vmem:[%s194 + $0x108] sm:$0xff]
        %v328 = vld [vmem:[%s194 + $0x110] sm:$0xff]
        %v329 = vld [vmem:[%s194 + $0x118] sm:$0xff]
        %v330 = vld [vmem:[%s194 + $0x120] sm:$0xff]
        %v331 = vld [vmem:[%s194 + $0x128] sm:$0xff]
        %v332 = vld [vmem:[%s194 + $0x130] sm:$0xff]
        %v333 = vld [vmem:[%s194 + $0x138] sm:$0xff]
        %v334 = vld [vmem:[%s194 + $0x140] sm:$0xff]
        %v335 = vld [vmem:[%s194 + $0x148] sm:$0xff]
        %v336 = vld [vmem:[%s194 + $0x150] sm:$0xff]
        %v337 = vld [vmem:[%s194 + $0x158] sm:$0xff]
        %v338 = vld [vmem:[%s194 + $0x160] sm:$0xff]
        %v339 = vld [vmem:[%s194 + $0x168] sm:$0xff]
        %v340 = vld [vmem:[%s194 + $0x170] sm:$0xff]
        %v341 = vld [vmem:[%s194 + $0x178] sm:$0xff]
        %v342 = vld [vmem:[%s194 + $0x180] sm:$0xff]
        %v343 = vld [vmem:[%s194 + $0x188] sm:$0xff]
        %v344 = vld [vmem:[%s194 + $0x190] sm:$0xff]
        %v345 = vld [vmem:[%s194 + $0x198] sm:$0xff]
        %v346 = vld [vmem:[%s194 + $0x1a0] sm:$0xff]
        %v347 = vld [vmem:[%s194 + $0x1a8] sm:$0xff]
        %v348 = vld [vmem:[%s194 + $0x1b0] sm:$0xff]
        %v349 = vld [vmem:[%s194 + $0x1b8] sm:$0xff]
        %v350 = vld [vmem:[%s194 + $0x1c0] sm:$0xff]
        %v351 = vld [vmem:[%s194 + $0x1c8] sm:$0xff]
        %v352 = vld [vmem:[%s194 + $0x1d0] sm:$0xff]
        %v353 = vld [vmem:[%s194 + $0x1d8] sm:$0xff]
        %v354 = vld [vmem:[%s194 + $0x1e0] sm:$0xff]
        %v355 = vld [vmem:[%s194 + $0x1e8] sm:$0xff]
        %v356 = vld [vmem:[%s194 + $0x1f0] sm:$0xff]
        %v357 = vld [vmem:[%s194 + $0x1f8] sm:$0xff]
        %v358 = vld [vmem:[%s194 + $0x200] sm:$0xff]
        %v359 = vld [vmem:[%s194 + $0x208] sm:$0xff]
        %v360 = vld [vmem:[%s194 + $0x210] sm:$0xff]
        %v361 = vld [vmem:[%s194 + $0x218] sm:$0xff]
        %v362 = vld [vmem:[%s194 + $0x220] sm:$0xff]
        %v363 = vld [vmem:[%s194 + $0x228] sm:$0xff]
        %v364 = vld [vmem:[%s194 + $0x230] sm:$0xff]
        %v365 = vld [vmem:[%s194 + $0x238] sm:$0xff]
        %v366 = vld [vmem:[%s194 + $0x240] sm:$0xff]
        %v367 = vld [vmem:[%s194 + $0x248] sm:$0xff]
        %v368 = vld [vmem:[%s194 + $0x250] sm:$0xff]
        %v369 = vld [vmem:[%s194 + $0x258] sm:$0xff]
        %v370 = vld [vmem:[%s194 + $0x260] sm:$0xff]
        %v371 = vld [vmem:[%s194 + $0x268] sm:$0xff]
        %v372 = vld [vmem:[%s194 + $0x270] sm:$0xff]
        %v373 = vld [vmem:[%s194 + $0x278] sm:$0xff]
        %v374 = vld [vmem:[%s194 + $0x280] sm:$0xff]
        %v375 = vld [vmem:[%s194 + $0x288] sm:$0xff]
        %v376 = vld [vmem:[%s194 + $0x290] sm:$0xff]
        %v377 = vld [vmem:[%s194 + $0x298] sm:$0xff]
        %v378 = vld [vmem:[%s194 + $0x2a0] sm:$0xff]
        %v379 = vld [vmem:[%s194 + $0x2a8] sm:$0xff]
        %v380 = vld [vmem:[%s194 + $0x2b0] sm:$0xff]
        %v381 = vld [vmem:[%s194 + $0x2b8] sm:$0xff]
        %v382 = vld [vmem:[%s194 + $0x2c0] sm:$0xff]
        %v383 = vld [vmem:[%s194 + $0x2c8] sm:$0xff]
        %v384 = vld [vmem:[%s194 + $0x2d0] sm:$0xff]
        %v385 = vld [vmem:[%s194 + $0x2d8] sm:$0xff]
        %v386 = vld [vmem:[%s194 + $0x2e0] sm:$0xff]
        %v387 = vld [vmem:[%s194 + $0x2e8] sm:$0xff]
        %v388 = vld [vmem:[%s194 + $0x2f0] sm:$0xff]
        %v389 = vld [vmem:[%s194 + $0x2f8] sm:$0xff]
        %v390 = vld [vmem:[%s194 + $0x300] sm:$0xff]
        %v391 = vld [vmem:[%s194 + $0x308] sm:$0xff]
        %v392 = vld [vmem:[%s194 + $0x310] sm:$0xff]
        %v393 = vld [vmem:[%s194 + $0x318] sm:$0xff]
        %v394 = vld [vmem:[%s194 + $0x320] sm:$0xff]
        %v395 = vld [vmem:[%s194 + $0x328] sm:$0xff]
        %v396 = vld [vmem:[%s194 + $0x330] sm:$0xff]
        %v397 = vld [vmem:[%s194 + $0x338] sm:$0xff]
        %v398 = vld [vmem:[%s194 + $0x340] sm:$0xff]
        %v399 = vld [vmem:[%s194 + $0x348] sm:$0xff]
        %v400 = vld [vmem:[%s194 + $0x350] sm:$0xff]
        %v401 = vld [vmem:[%s194 + $0x358] sm:$0xff]
        %v402 = vld [vmem:[%s194 + $0x360] sm:$0xff]
        %v403 = vld [vmem:[%s194 + $0x368] sm:$0xff]
        %v404 = vld [vmem:[%s194 + $0x370] sm:$0xff]
        %v405 = vld [vmem:[%s194 + $0x378] sm:$0xff]
        %v406 = vld [vmem:[%s194 + $0x380] sm:$0xff]
        %v407 = vld [vmem:[%s194 + $0x388] sm:$0xff]
        %v408 = vld [vmem:[%s194 + $0x390] sm:$0xff]
        %v409 = vld [vmem:[%s194 + $0x398] sm:$0xff]
        %v410 = vld [vmem:[%s194 + $0x3a0] sm:$0xff]
        %v411 = vld [vmem:[%s194 + $0x3a8] sm:$0xff]
        %v412 = vld [vmem:[%s194 + $0x3b0] sm:$0xff]
        %v413 = vld [vmem:[%s194 + $0x3b8] sm:$0xff]
        %v414 = vld [vmem:[%s194 + $0x3c0] sm:$0xff]
        %v415 = vld [vmem:[%s194 + $0x3c8] sm:$0xff]
        %v416 = vld [vmem:[%s194 + $0x3d0] sm:$0xff]
        %v417 = vld [vmem:[%s194 + $0x3d8] sm:$0xff]
        %v418 = vld [vmem:[%s194 + $0x3e0] sm:$0xff]
        %v419 = vld [vmem:[%s194 + $0x3e8] sm:$0xff]
        %v420 = vld [vmem:[%s194 + $0x3f0] sm:$0xff]
        %v421 = vld [vmem:[%s194 + $0x3f8] sm:$0xff]
        %s422 = sshra.s32 %s261, 3
        %s423 = sand.u32 %s261, 7
        %s424 = smul.addr %s422, 4
        %s425 = scalar_lea.vmem [#allocation6], %s424
        %v426 = vld [vmem:[%s425] sm:$0xf]
        %v427 = vld [vmem:[%s425 + $0x4] sm:$0xf]
        %v428 = vld [vmem:[%s425 + $0x8] sm:$0xf]
        %v429 = vld [vmem:[%s425 + $0xc] sm:$0xf]
        %v430 = vld [vmem:[%s425 + $0x10] sm:$0xf]
        %v431 = vld [vmem:[%s425 + $0x14] sm:$0xf]
        %v432 = vld [vmem:[%s425 + $0x18] sm:$0xf]
        %v433 = vld [vmem:[%s425 + $0x1c] sm:$0xf]
        %v434 = vld [vmem:[%s425 + $0x20] sm:$0xf]
        %v435 = vld [vmem:[%s425 + $0x24] sm:$0xf]
        %v436 = vld [vmem:[%s425 + $0x28] sm:$0xf]
        %v437 = vld [vmem:[%s425 + $0x2c] sm:$0xf]
        %v438 = vld [vmem:[%s425 + $0x30] sm:$0xf]
        %v439 = vld [vmem:[%s425 + $0x34] sm:$0xf]
        %v440 = vld [vmem:[%s425 + $0x38] sm:$0xf]
        %v441 = vld [vmem:[%s425 + $0x3c] sm:$0xf]
        %v442 = vld [vmem:[%s425 + $0x40] sm:$0xf]
        %v443 = vld [vmem:[%s425 + $0x44] sm:$0xf]
        %v444 = vld [vmem:[%s425 + $0x48] sm:$0xf]
        %v445 = vld [vmem:[%s425 + $0x4c] sm:$0xf]
        %v446 = vld [vmem:[%s425 + $0x50] sm:$0xf]
        %v447 = vld [vmem:[%s425 + $0x54] sm:$0xf]
        %v448 = vld [vmem:[%s425 + $0x58] sm:$0xf]
        %v449 = vld [vmem:[%s425 + $0x5c] sm:$0xf]
        %v450 = vld [vmem:[%s425 + $0x60] sm:$0xf]
        %v451 = vld [vmem:[%s425 + $0x64] sm:$0xf]
        %v452 = vld [vmem:[%s425 + $0x68] sm:$0xf]
        %v453 = vld [vmem:[%s425 + $0x6c] sm:$0xf]
        %v454 = vld [vmem:[%s425 + $0x70] sm:$0xf]
        %v455 = vld [vmem:[%s425 + $0x74] sm:$0xf]
        %v456 = vld [vmem:[%s425 + $0x78] sm:$0xf]
        %v457 = vld [vmem:[%s425 + $0x7c] sm:$0xf]
        %v458 = vld [vmem:[%s425 + $0x80] sm:$0xf]
        %v459 = vld [vmem:[%s425 + $0x84] sm:$0xf]
        %v460 = vld [vmem:[%s425 + $0x88] sm:$0xf]
        %v461 = vld [vmem:[%s425 + $0x8c] sm:$0xf]
        %v462 = vld [vmem:[%s425 + $0x90] sm:$0xf]
        %v463 = vld [vmem:[%s425 + $0x94] sm:$0xf]
        %v464 = vld [vmem:[%s425 + $0x98] sm:$0xf]
        %v465 = vld [vmem:[%s425 + $0x9c] sm:$0xf]
        %v466 = vld [vmem:[%s425 + $0xa0] sm:$0xf]
        %v467 = vld [vmem:[%s425 + $0xa4] sm:$0xf]
        %v468 = vld [vmem:[%s425 + $0xa8] sm:$0xf]
        %v469 = vld [vmem:[%s425 + $0xac] sm:$0xf]
        %v470 = vld [vmem:[%s425 + $0xb0] sm:$0xf]
        %v471 = vld [vmem:[%s425 + $0xb4] sm:$0xf]
        %v472 = vld [vmem:[%s425 + $0xb8] sm:$0xf]
        %v473 = vld [vmem:[%s425 + $0xbc] sm:$0xf]
        %v474 = vld [vmem:[%s425 + $0xc0] sm:$0xf]
        %v475 = vld [vmem:[%s425 + $0xc4] sm:$0xf]
        %v476 = vld [vmem:[%s425 + $0xc8] sm:$0xf]
        %v477 = vld [vmem:[%s425 + $0xcc] sm:$0xf]
        %v478 = vld [vmem:[%s425 + $0xd0] sm:$0xf]
        %v479 = vld [vmem:[%s425 + $0xd4] sm:$0xf]
        %v480 = vld [vmem:[%s425 + $0xd8] sm:$0xf]
        %v481 = vld [vmem:[%s425 + $0xdc] sm:$0xf]
        %v482 = vld [vmem:[%s425 + $0xe0] sm:$0xf]
        %v483 = vld [vmem:[%s425 + $0xe4] sm:$0xf]
        %v484 = vld [vmem:[%s425 + $0xe8] sm:$0xf]
        %v485 = vld [vmem:[%s425 + $0xec] sm:$0xf]
        %v486 = vld [vmem:[%s425 + $0xf0] sm:$0xf]
        %v487 = vld [vmem:[%s425 + $0xf4] sm:$0xf]
        %v488 = vld [vmem:[%s425 + $0xf8] sm:$0xf]
        %v489 = vld [vmem:[%s425 + $0xfc] sm:$0xf]
        %v490 = vld [vmem:[%s425 + $0x100] sm:$0xf]
        %v491 = vld [vmem:[%s425 + $0x104] sm:$0xf]
        %v492 = vld [vmem:[%s425 + $0x108] sm:$0xf]
        %v493 = vld [vmem:[%s425 + $0x10c] sm:$0xf]
        %v494 = vld [vmem:[%s425 + $0x110] sm:$0xf]
        %v495 = vld [vmem:[%s425 + $0x114] sm:$0xf]
        %v496 = vld [vmem:[%s425 + $0x118] sm:$0xf]
        %v497 = vld [vmem:[%s425 + $0x11c] sm:$0xf]
        %v498 = vld [vmem:[%s425 + $0x120] sm:$0xf]
        %v499 = vld [vmem:[%s425 + $0x124] sm:$0xf]
        %v500 = vld [vmem:[%s425 + $0x128] sm:$0xf]
        %v501 = vld [vmem:[%s425 + $0x12c] sm:$0xf]
        %v502 = vld [vmem:[%s425 + $0x130] sm:$0xf]
        %v503 = vld [vmem:[%s425 + $0x134] sm:$0xf]
        %v504 = vld [vmem:[%s425 + $0x138] sm:$0xf]
        %v505 = vld [vmem:[%s425 + $0x13c] sm:$0xf]
        %v506 = vld [vmem:[%s425 + $0x140] sm:$0xf]
        %v507 = vld [vmem:[%s425 + $0x144] sm:$0xf]
        %v508 = vld [vmem:[%s425 + $0x148] sm:$0xf]
        %v509 = vld [vmem:[%s425 + $0x14c] sm:$0xf]
        %v510 = vld [vmem:[%s425 + $0x150] sm:$0xf]
        %v511 = vld [vmem:[%s425 + $0x154] sm:$0xf]
        %v512 = vld [vmem:[%s425 + $0x158] sm:$0xf]
        %v513 = vld [vmem:[%s425 + $0x15c] sm:$0xf]
        %v514 = vld [vmem:[%s425 + $0x160] sm:$0xf]
        %v515 = vld [vmem:[%s425 + $0x164] sm:$0xf]
        %v516 = vld [vmem:[%s425 + $0x168] sm:$0xf]
        %v517 = vld [vmem:[%s425 + $0x16c] sm:$0xf]
        %v518 = vld [vmem:[%s425 + $0x170] sm:$0xf]
        %v519 = vld [vmem:[%s425 + $0x174] sm:$0xf]
        %v520 = vld [vmem:[%s425 + $0x178] sm:$0xf]
        %v521 = vld [vmem:[%s425 + $0x17c] sm:$0xf]
        %v522 = vld [vmem:[%s425 + $0x180] sm:$0xf]
        %v523 = vld [vmem:[%s425 + $0x184] sm:$0xf]
        %v524 = vld [vmem:[%s425 + $0x188] sm:$0xf]
        %v525 = vld [vmem:[%s425 + $0x18c] sm:$0xf]
        %v526 = vld [vmem:[%s425 + $0x190] sm:$0xf]
        %v527 = vld [vmem:[%s425 + $0x194] sm:$0xf]
        %v528 = vld [vmem:[%s425 + $0x198] sm:$0xf]
        %v529 = vld [vmem:[%s425 + $0x19c] sm:$0xf]
        %v530 = vld [vmem:[%s425 + $0x1a0] sm:$0xf]
        %v531 = vld [vmem:[%s425 + $0x1a4] sm:$0xf]
        %v532 = vld [vmem:[%s425 + $0x1a8] sm:$0xf]
        %v533 = vld [vmem:[%s425 + $0x1ac] sm:$0xf]
        %v534 = vld [vmem:[%s425 + $0x1b0] sm:$0xf]
        %v535 = vld [vmem:[%s425 + $0x1b4] sm:$0xf]
        %v536 = vld [vmem:[%s425 + $0x1b8] sm:$0xf]
        %v537 = vld [vmem:[%s425 + $0x1bc] sm:$0xf]
        %v538 = vld [vmem:[%s425 + $0x1c0] sm:$0xf]
        %v539 = vld [vmem:[%s425 + $0x1c4] sm:$0xf]
        %v540 = vld [vmem:[%s425 + $0x1c8] sm:$0xf]
        %v541 = vld [vmem:[%s425 + $0x1cc] sm:$0xf]
        %v542 = vld [vmem:[%s425 + $0x1d0] sm:$0xf]
        %v543 = vld [vmem:[%s425 + $0x1d4] sm:$0xf]
        %v544 = vld [vmem:[%s425 + $0x1d8] sm:$0xf]
        %v545 = vld [vmem:[%s425 + $0x1dc] sm:$0xf]
        %v546 = vld [vmem:[%s425 + $0x1e0] sm:$0xf]
        %v547 = vld [vmem:[%s425 + $0x1e4] sm:$0xf]
        %v548 = vld [vmem:[%s425 + $0x1e8] sm:$0xf]
        %v549 = vld [vmem:[%s425 + $0x1ec] sm:$0xf]
        %v550 = vld [vmem:[%s425 + $0x1f0] sm:$0xf]
        %v551 = vld [vmem:[%s425 + $0x1f4] sm:$0xf]
        %v552 = vld [vmem:[%s425 + $0x1f8] sm:$0xf]
        %v553 = vld [vmem:[%s425 + $0x1fc] sm:$0xf]
        %v682 = vunpack.c.l.b16 %v294
        %v683 = vunpack.c.h.b16 %v294
        %v684 = vunpack.c.l.b16 %v295
        %v685 = vunpack.c.h.b16 %v295
        %v686 = vunpack.c.l.b16 %v296
        %v687 = vunpack.c.h.b16 %v296
        %v688 = vunpack.c.l.b16 %v297
        %v689 = vunpack.c.h.b16 %v297
        %v690 = vunpack.c.l.b16 %v298
        %v691 = vunpack.c.h.b16 %v298
        %v692 = vunpack.c.l.b16 %v299
        %v693 = vunpack.c.h.b16 %v299
        %v694 = vunpack.c.l.b16 %v300
        %v695 = vunpack.c.h.b16 %v300
        %v696 = vunpack.c.l.b16 %v301
        %v697 = vunpack.c.h.b16 %v301
        %v698 = vunpack.c.l.b16 %v302
        %v699 = vunpack.c.h.b16 %v302
        %v700 = vunpack.c.l.b16 %v303
        %v701 = vunpack.c.h.b16 %v303
        %v702 = vunpack.c.l.b16 %v304
        %v703 = vunpack.c.h.b16 %v304
        %v704 = vunpack.c.l.b16 %v305
        %v705 = vunpack.c.h.b16 %v305
        %v706 = vunpack.c.l.b16 %v306
        %v707 = vunpack.c.h.b16 %v306
        %v708 = vunpack.c.l.b16 %v307
        %v709 = vunpack.c.h.b16 %v307
        %v710 = vunpack.c.l.b16 %v308
        %v711 = vunpack.c.h.b16 %v308
        %v712 = vunpack.c.l.b16 %v309
        %v713 = vunpack.c.h.b16 %v309
        %v714 = vunpack.c.l.b16 %v310
        %v715 = vunpack.c.h.b16 %v310
        %v716 = vunpack.c.l.b16 %v311
        %v717 = vunpack.c.h.b16 %v311
        %v718 = vunpack.c.l.b16 %v312
        %v719 = vunpack.c.h.b16 %v312
        %v720 = vunpack.c.l.b16 %v313
        %v721 = vunpack.c.h.b16 %v313
        %v722 = vunpack.c.l.b16 %v314
        %v723 = vunpack.c.h.b16 %v314
        %v724 = vunpack.c.l.b16 %v315
        %v725 = vunpack.c.h.b16 %v315
        %v726 = vunpack.c.l.b16 %v316
        %v727 = vunpack.c.h.b16 %v316
        %v728 = vunpack.c.l.b16 %v317
        %v729 = vunpack.c.h.b16 %v317
        %v730 = vunpack.c.l.b16 %v318
        %v731 = vunpack.c.h.b16 %v318
        %v732 = vunpack.c.l.b16 %v319
        %v733 = vunpack.c.h.b16 %v319
        %v734 = vunpack.c.l.b16 %v320
        %v735 = vunpack.c.h.b16 %v320
        %v736 = vunpack.c.l.b16 %v321
        %v737 = vunpack.c.h.b16 %v321
        %v738 = vunpack.c.l.b16 %v322
        %v739 = vunpack.c.h.b16 %v322
        %v740 = vunpack.c.l.b16 %v323
        %v741 = vunpack.c.h.b16 %v323
        %v742 = vunpack.c.l.b16 %v324
        %v743 = vunpack.c.h.b16 %v324
        %v744 = vunpack.c.l.b16 %v325
        %v745 = vunpack.c.h.b16 %v325
        %v746 = vunpack.c.l.b16 %v326
        %v747 = vunpack.c.h.b16 %v326
        %v748 = vunpack.c.l.b16 %v327
        %v749 = vunpack.c.h.b16 %v327
        %v750 = vunpack.c.l.b16 %v328
        %v751 = vunpack.c.h.b16 %v328
        %v752 = vunpack.c.l.b16 %v329
        %v753 = vunpack.c.h.b16 %v329
        %v754 = vunpack.c.l.b16 %v330
        %v755 = vunpack.c.h.b16 %v330
        %v756 = vunpack.c.l.b16 %v331
        %v757 = vunpack.c.h.b16 %v331
        %v758 = vunpack.c.l.b16 %v332
        %v759 = vunpack.c.h.b16 %v332
        %v760 = vunpack.c.l.b16 %v333
        %v761 = vunpack.c.h.b16 %v333
        %v762 = vunpack.c.l.b16 %v334
        %v763 = vunpack.c.h.b16 %v334
        %v764 = vunpack.c.l.b16 %v335
        %v765 = vunpack.c.h.b16 %v335
        %v766 = vunpack.c.l.b16 %v336
        %v767 = vunpack.c.h.b16 %v336
        %v768 = vunpack.c.l.b16 %v337
        %v769 = vunpack.c.h.b16 %v337
        %v770 = vunpack.c.l.b16 %v338
        %v771 = vunpack.c.h.b16 %v338
        %v772 = vunpack.c.l.b16 %v339
        %v773 = vunpack.c.h.b16 %v339
        %v774 = vunpack.c.l.b16 %v340
        %v775 = vunpack.c.h.b16 %v340
        %v776 = vunpack.c.l.b16 %v341
        %v777 = vunpack.c.h.b16 %v341
        %v778 = vunpack.c.l.b16 %v342
        %v779 = vunpack.c.h.b16 %v342
        %v780 = vunpack.c.l.b16 %v343
        %v781 = vunpack.c.h.b16 %v343
        %v782 = vunpack.c.l.b16 %v344
        %v783 = vunpack.c.h.b16 %v344
        %v784 = vunpack.c.l.b16 %v345
        %v785 = vunpack.c.h.b16 %v345
        %v786 = vunpack.c.l.b16 %v346
        %v787 = vunpack.c.h.b16 %v346
        %v788 = vunpack.c.l.b16 %v347
        %v789 = vunpack.c.h.b16 %v347
        %v790 = vunpack.c.l.b16 %v348
        %v791 = vunpack.c.h.b16 %v348
        %v792 = vunpack.c.l.b16 %v349
        %v793 = vunpack.c.h.b16 %v349
        %v794 = vunpack.c.l.b16 %v350
        %v795 = vunpack.c.h.b16 %v350
        %v796 = vunpack.c.l.b16 %v351
        %v797 = vunpack.c.h.b16 %v351
        %v798 = vunpack.c.l.b16 %v352
        %v799 = vunpack.c.h.b16 %v352
        %v800 = vunpack.c.l.b16 %v353
        %v801 = vunpack.c.h.b16 %v353
        %v802 = vunpack.c.l.b16 %v354
        %v803 = vunpack.c.h.b16 %v354
        %v804 = vunpack.c.l.b16 %v355
        %v805 = vunpack.c.h.b16 %v355
        %v806 = vunpack.c.l.b16 %v356
        %v807 = vunpack.c.h.b16 %v356
        %v808 = vunpack.c.l.b16 %v357
        %v809 = vunpack.c.h.b16 %v357
        %v810 = vunpack.c.l.b16 %v358
        %v811 = vunpack.c.h.b16 %v358
        %v812 = vunpack.c.l.b16 %v359
        %v813 = vunpack.c.h.b16 %v359
        %v814 = vunpack.c.l.b16 %v360
        %v815 = vunpack.c.h.b16 %v360
        %v816 = vunpack.c.l.b16 %v361
        %v817 = vunpack.c.h.b16 %v361
        %v818 = vunpack.c.l.b16 %v362
        %v819 = vunpack.c.h.b16 %v362
        %v820 = vunpack.c.l.b16 %v363
        %v821 = vunpack.c.h.b16 %v363
        %v822 = vunpack.c.l.b16 %v364
        %v823 = vunpack.c.h.b16 %v364
        %v824 = vunpack.c.l.b16 %v365
        %v825 = vunpack.c.h.b16 %v365
        %v826 = vunpack.c.l.b16 %v366
        %v827 = vunpack.c.h.b16 %v366
        %v828 = vunpack.c.l.b16 %v367
        %v829 = vunpack.c.h.b16 %v367
        %v830 = vunpack.c.l.b16 %v368
        %v831 = vunpack.c.h.b16 %v368
        %v832 = vunpack.c.l.b16 %v369
        %v833 = vunpack.c.h.b16 %v369
        %v834 = vunpack.c.l.b16 %v370
        %v835 = vunpack.c.h.b16 %v370
        %v836 = vunpack.c.l.b16 %v371
        %v837 = vunpack.c.h.b16 %v371
        %v838 = vunpack.c.l.b16 %v372
        %v839 = vunpack.c.h.b16 %v372
        %v840 = vunpack.c.l.b16 %v373
        %v841 = vunpack.c.h.b16 %v373
        %v842 = vunpack.c.l.b16 %v374
        %v843 = vunpack.c.h.b16 %v374
        %v844 = vunpack.c.l.b16 %v375
        %v845 = vunpack.c.h.b16 %v375
        %v846 = vunpack.c.l.b16 %v376
        %v847 = vunpack.c.h.b16 %v376
        %v848 = vunpack.c.l.b16 %v377
        %v849 = vunpack.c.h.b16 %v377
        %v850 = vunpack.c.l.b16 %v378
        %v851 = vunpack.c.h.b16 %v378
        %v852 = vunpack.c.l.b16 %v379
        %v853 = vunpack.c.h.b16 %v379
        %v854 = vunpack.c.l.b16 %v380
        %v855 = vunpack.c.h.b16 %v380
        %v856 = vunpack.c.l.b16 %v381
        %v857 = vunpack.c.h.b16 %v381
        %v858 = vunpack.c.l.b16 %v382
        %v859 = vunpack.c.h.b16 %v382
        %v860 = vunpack.c.l.b16 %v383
        %v861 = vunpack.c.h.b16 %v383
        %v862 = vunpack.c.l.b16 %v384
        %v863 = vunpack.c.h.b16 %v384
        %v864 = vunpack.c.l.b16 %v385
        %v865 = vunpack.c.h.b16 %v385
        %v866 = vunpack.c.l.b16 %v386
        %v867 = vunpack.c.h.b16 %v386
        %v868 = vunpack.c.l.b16 %v387
        %v869 = vunpack.c.h.b16 %v387
        %v870 = vunpack.c.l.b16 %v388
        %v871 = vunpack.c.h.b16 %v388
        %v872 = vunpack.c.l.b16 %v389
        %v873 = vunpack.c.h.b16 %v389
        %v874 = vunpack.c.l.b16 %v390
        %v875 = vunpack.c.h.b16 %v390
        %v876 = vunpack.c.l.b16 %v391
        %v877 = vunpack.c.h.b16 %v391
        %v878 = vunpack.c.l.b16 %v392
        %v879 = vunpack.c.h.b16 %v392
        %v880 = vunpack.c.l.b16 %v393
        %v881 = vunpack.c.h.b16 %v393
        %v882 = vunpack.c.l.b16 %v394
        %v883 = vunpack.c.h.b16 %v394
        %v884 = vunpack.c.l.b16 %v395
        %v885 = vunpack.c.h.b16 %v395
        %v886 = vunpack.c.l.b16 %v396
        %v887 = vunpack.c.h.b16 %v396
        %v888 = vunpack.c.l.b16 %v397
        %v889 = vunpack.c.h.b16 %v397
        %v890 = vunpack.c.l.b16 %v398
        %v891 = vunpack.c.h.b16 %v398
        %v892 = vunpack.c.l.b16 %v399
        %v893 = vunpack.c.h.b16 %v399
        %v894 = vunpack.c.l.b16 %v400
        %v895 = vunpack.c.h.b16 %v400
        %v896 = vunpack.c.l.b16 %v401
        %v897 = vunpack.c.h.b16 %v401
        %v898 = vunpack.c.l.b16 %v402
        %v899 = vunpack.c.h.b16 %v402
        %v900 = vunpack.c.l.b16 %v403
        %v901 = vunpack.c.h.b16 %v403
        %v902 = vunpack.c.l.b16 %v404
        %v903 = vunpack.c.h.b16 %v404
        %v904 = vunpack.c.l.b16 %v405
        %v905 = vunpack.c.h.b16 %v405
        %v906 = vunpack.c.l.b16 %v406
        %v907 = vunpack.c.h.b16 %v406
        %v908 = vunpack.c.l.b16 %v407
        %v909 = vunpack.c.h.b16 %v407
        %v910 = vunpack.c.l.b16 %v408
        %v911 = vunpack.c.h.b16 %v408
        %v912 = vunpack.c.l.b16 %v409
        %v913 = vunpack.c.h.b16 %v409
        %v914 = vunpack.c.l.b16 %v410
        %v915 = vunpack.c.h.b16 %v410
        %v916 = vunpack.c.l.b16 %v411
        %v917 = vunpack.c.h.b16 %v411
        %v918 = vunpack.c.l.b16 %v412
        %v919 = vunpack.c.h.b16 %v412
        %v920 = vunpack.c.l.b16 %v413
        %v921 = vunpack.c.h.b16 %v413
        %v922 = vunpack.c.l.b16 %v414
        %v923 = vunpack.c.h.b16 %v414
        %v924 = vunpack.c.l.b16 %v415
        %v925 = vunpack.c.h.b16 %v415
        %v926 = vunpack.c.l.b16 %v416
        %v927 = vunpack.c.h.b16 %v416
        %v928 = vunpack.c.l.b16 %v417
        %v929 = vunpack.c.h.b16 %v417
        %v930 = vunpack.c.l.b16 %v418
        %v931 = vunpack.c.h.b16 %v418
        %v932 = vunpack.c.l.b16 %v419
        %v933 = vunpack.c.h.b16 %v419
        %v934 = vunpack.c.l.b16 %v420
        %v935 = vunpack.c.h.b16 %v420
        %v936 = vunpack.c.l.b16 %v421
        %v937 = vunpack.c.h.b16 %v421
        %v938 = vpack.c.b16 %v690, %v682
        %v939 = vpack.c.b16 %v691, %v683
        %v940 = vpack.c.b16 %v692, %v684
        %v941 = vpack.c.b16 %v693, %v685
        %v942 = vpack.c.b16 %v694, %v686
        %v943 = vpack.c.b16 %v695, %v687
        %v944 = vpack.c.b16 %v696, %v688
        %v945 = vpack.c.b16 %v697, %v689
        %v946 = vpack.c.b16 %v706, %v698
        %v947 = vpack.c.b16 %v707, %v699
        %v948 = vpack.c.b16 %v708, %v700
        %v949 = vpack.c.b16 %v709, %v701
        %v950 = vpack.c.b16 %v710, %v702
        %v951 = vpack.c.b16 %v711, %v703
        %v952 = vpack.c.b16 %v712, %v704
        %v953 = vpack.c.b16 %v713, %v705
        %v954 = vpack.c.b16 %v722, %v714
        %v955 = vpack.c.b16 %v723, %v715
        %v956 = vpack.c.b16 %v724, %v716
        %v957 = vpack.c.b16 %v725, %v717
        %v958 = vpack.c.b16 %v726, %v718
        %v959 = vpack.c.b16 %v727, %v719
        %v960 = vpack.c.b16 %v728, %v720
        %v961 = vpack.c.b16 %v729, %v721
        %v962 = vpack.c.b16 %v738, %v730
        %v963 = vpack.c.b16 %v739, %v731
        %v964 = vpack.c.b16 %v740, %v732
        %v965 = vpack.c.b16 %v741, %v733
        %v966 = vpack.c.b16 %v742, %v734
        %v967 = vpack.c.b16 %v743, %v735
        %v968 = vpack.c.b16 %v744, %v736
        %v969 = vpack.c.b16 %v745, %v737
        %v970 = vpack.c.b16 %v754, %v746
        %v971 = vpack.c.b16 %v755, %v747
        %v972 = vpack.c.b16 %v756, %v748
        %v973 = vpack.c.b16 %v757, %v749
        %v974 = vpack.c.b16 %v758, %v750
        %v975 = vpack.c.b16 %v759, %v751
        %v976 = vpack.c.b16 %v760, %v752
        %v977 = vpack.c.b16 %v761, %v753
        %v978 = vpack.c.b16 %v770, %v762
        %v979 = vpack.c.b16 %v771, %v763
        %v980 = vpack.c.b16 %v772, %v764
        %v981 = vpack.c.b16 %v773, %v765
        %v982 = vpack.c.b16 %v774, %v766
        %v983 = vpack.c.b16 %v775, %v767
        %v984 = vpack.c.b16 %v776, %v768
        %v985 = vpack.c.b16 %v777, %v769
        %v986 = vpack.c.b16 %v786, %v778
        %v987 = vpack.c.b16 %v787, %v779
        %v988 = vpack.c.b16 %v788, %v780
        %v989 = vpack.c.b16 %v789, %v781
        %v990 = vpack.c.b16 %v790, %v782
        %v991 = vpack.c.b16 %v791, %v783
        %v992 = vpack.c.b16 %v792, %v784
        %v993 = vpack.c.b16 %v793, %v785
        %v994 = vpack.c.b16 %v802, %v794
        %v995 = vpack.c.b16 %v803, %v795
        %v996 = vpack.c.b16 %v804, %v796
        %v997 = vpack.c.b16 %v805, %v797
        %v998 = vpack.c.b16 %v806, %v798
        %v999 = vpack.c.b16 %v807, %v799
        %v1000 = vpack.c.b16 %v808, %v800
        %v1001 = vpack.c.b16 %v809, %v801
        %v1002 = vpack.c.b16 %v818, %v810
        %v1003 = vpack.c.b16 %v819, %v811
        %v1004 = vpack.c.b16 %v820, %v812
        %v1005 = vpack.c.b16 %v821, %v813
        %v1006 = vpack.c.b16 %v822, %v814
        %v1007 = vpack.c.b16 %v823, %v815
        %v1008 = vpack.c.b16 %v824, %v816
        %v1009 = vpack.c.b16 %v825, %v817
        %v1010 = vpack.c.b16 %v834, %v826
        %v1011 = vpack.c.b16 %v835, %v827
        %v1012 = vpack.c.b16 %v836, %v828
        %v1013 = vpack.c.b16 %v837, %v829
        %v1014 = vpack.c.b16 %v838, %v830
        %v1015 = vpack.c.b16 %v839, %v831
        %v1016 = vpack.c.b16 %v840, %v832
        %v1017 = vpack.c.b16 %v841, %v833
        %v1018 = vpack.c.b16 %v850, %v842
        %v1019 = vpack.c.b16 %v851, %v843
        %v1020 = vpack.c.b16 %v852, %v844
        %v1021 = vpack.c.b16 %v853, %v845
        %v1022 = vpack.c.b16 %v854, %v846
        %v1023 = vpack.c.b16 %v855, %v847
        %v1024 = vpack.c.b16 %v856, %v848
        %v1025 = vpack.c.b16 %v857, %v849
        %v1026 = vpack.c.b16 %v866, %v858
        %v1027 = vpack.c.b16 %v867, %v859
        %v1028 = vpack.c.b16 %v868, %v860
        %v1029 = vpack.c.b16 %v869, %v861
        %v1030 = vpack.c.b16 %v870, %v862
        %v1031 = vpack.c.b16 %v871, %v863
        %v1032 = vpack.c.b16 %v872, %v864
        %v1033 = vpack.c.b16 %v873, %v865
        %v1034 = vpack.c.b16 %v882, %v874
        %v1035 = vpack.c.b16 %v883, %v875
        %v1036 = vpack.c.b16 %v884, %v876
        %v1037 = vpack.c.b16 %v885, %v877
        %v1038 = vpack.c.b16 %v886, %v878
        %v1039 = vpack.c.b16 %v887, %v879
        %v1040 = vpack.c.b16 %v888, %v880
        %v1041 = vpack.c.b16 %v889, %v881
        %v1042 = vpack.c.b16 %v898, %v890
        %v1043 = vpack.c.b16 %v899, %v891
        %v1044 = vpack.c.b16 %v900, %v892
        %v1045 = vpack.c.b16 %v901, %v893
        %v1046 = vpack.c.b16 %v902, %v894
        %v1047 = vpack.c.b16 %v903, %v895
        %v1048 = vpack.c.b16 %v904, %v896
        %v1049 = vpack.c.b16 %v905, %v897
        %v1050 = vpack.c.b16 %v914, %v906
        %v1051 = vpack.c.b16 %v915, %v907
        %v1052 = vpack.c.b16 %v916, %v908
        %v1053 = vpack.c.b16 %v917, %v909
        %v1054 = vpack.c.b16 %v918, %v910
        %v1055 = vpack.c.b16 %v919, %v911
        %v1056 = vpack.c.b16 %v920, %v912
        %v1057 = vpack.c.b16 %v921, %v913
        %v1058 = vpack.c.b16 %v930, %v922
        %v1059 = vpack.c.b16 %v931, %v923
        %v1060 = vpack.c.b16 %v932, %v924
        %v1061 = vpack.c.b16 %v933, %v925
        %v1062 = vpack.c.b16 %v934, %v926
        %v1063 = vpack.c.b16 %v935, %v927
        %v1064 = vpack.c.b16 %v936, %v928
        %v1065 = vpack.c.b16 %v937, %v929
        %v1322 = vunpack.c.l.b16 %v426
        %v1323 = vunpack.c.l.b16 %v427
        %v1324 = vunpack.c.l.b16 %v428
        %v1325 = vunpack.c.l.b16 %v429
        %v1326 = vunpack.c.l.b16 %v430
        %v1327 = vunpack.c.l.b16 %v431
        %v1328 = vunpack.c.l.b16 %v432
        %v1329 = vunpack.c.l.b16 %v433
        %v1330 = vunpack.c.l.b16 %v434
        %v1331 = vunpack.c.l.b16 %v435
        %v1332 = vunpack.c.l.b16 %v436
        %v1333 = vunpack.c.l.b16 %v437
        %v1334 = vunpack.c.l.b16 %v438
        %v1335 = vunpack.c.l.b16 %v439
        %v1336 = vunpack.c.l.b16 %v440
        %v1337 = vunpack.c.l.b16 %v441
        %v1338 = vunpack.c.l.b16 %v442
        %v1339 = vunpack.c.l.b16 %v443
        %v1340 = vunpack.c.l.b16 %v444
        %v1341 = vunpack.c.l.b16 %v445
        %v1342 = vunpack.c.l.b16 %v446
        %v1343 = vunpack.c.l.b16 %v447
        %v1344 = vunpack.c.l.b16 %v448
        %v1345 = vunpack.c.l.b16 %v449
        %v1346 = vunpack.c.l.b16 %v450
        %v1347 = vunpack.c.l.b16 %v451
        %v1348 = vunpack.c.l.b16 %v452
        %v1349 = vunpack.c.l.b16 %v453
        %v1350 = vunpack.c.l.b16 %v454
        %v1351 = vunpack.c.l.b16 %v455
        %v1352 = vunpack.c.l.b16 %v456
        %v1353 = vunpack.c.l.b16 %v457
        %v1354 = vunpack.c.l.b16 %v458
        %v1355 = vunpack.c.l.b16 %v459
        %v1356 = vunpack.c.l.b16 %v460
        %v1357 = vunpack.c.l.b16 %v461
        %v1358 = vunpack.c.l.b16 %v462
        %v1359 = vunpack.c.l.b16 %v463
        %v1360 = vunpack.c.l.b16 %v464
        %v1361 = vunpack.c.l.b16 %v465
        %v1362 = vunpack.c.l.b16 %v466
        %v1363 = vunpack.c.l.b16 %v467
        %v1364 = vunpack.c.l.b16 %v468
        %v1365 = vunpack.c.l.b16 %v469
        %v1366 = vunpack.c.l.b16 %v470
        %v1367 = vunpack.c.l.b16 %v471
        %v1368 = vunpack.c.l.b16 %v472
        %v1369 = vunpack.c.l.b16 %v473
        %v1370 = vunpack.c.l.b16 %v474
        %v1371 = vunpack.c.l.b16 %v475
        %v1372 = vunpack.c.l.b16 %v476
        %v1373 = vunpack.c.l.b16 %v477
        %v1374 = vunpack.c.l.b16 %v478
        %v1375 = vunpack.c.l.b16 %v479
        %v1376 = vunpack.c.l.b16 %v480
        %v1377 = vunpack.c.l.b16 %v481
        %v1378 = vunpack.c.l.b16 %v482
        %v1379 = vunpack.c.l.b16 %v483
        %v1380 = vunpack.c.l.b16 %v484
        %v1381 = vunpack.c.l.b16 %v485
        %v1382 = vunpack.c.l.b16 %v486
        %v1383 = vunpack.c.l.b16 %v487
        %v1384 = vunpack.c.l.b16 %v488
        %v1385 = vunpack.c.l.b16 %v489
        %v1386 = vunpack.c.l.b16 %v490
        %v1387 = vunpack.c.l.b16 %v491
        %v1388 = vunpack.c.l.b16 %v492
        %v1389 = vunpack.c.l.b16 %v493
        %v1390 = vunpack.c.l.b16 %v494
        %v1391 = vunpack.c.l.b16 %v495
        %v1392 = vunpack.c.l.b16 %v496
        %v1393 = vunpack.c.l.b16 %v497
        %v1394 = vunpack.c.l.b16 %v498
        %v1395 = vunpack.c.l.b16 %v499
        %v1396 = vunpack.c.l.b16 %v500
        %v1397 = vunpack.c.l.b16 %v501
        %v1398 = vunpack.c.l.b16 %v502
        %v1399 = vunpack.c.l.b16 %v503
        %v1400 = vunpack.c.l.b16 %v504
        %v1401 = vunpack.c.l.b16 %v505
        %v1402 = vunpack.c.l.b16 %v506
        %v1403 = vunpack.c.l.b16 %v507
        %v1404 = vunpack.c.l.b16 %v508
        %v1405 = vunpack.c.l.b16 %v509
        %v1406 = vunpack.c.l.b16 %v510
        %v1407 = vunpack.c.l.b16 %v511
        %v1408 = vunpack.c.l.b16 %v512
        %v1409 = vunpack.c.l.b16 %v513
        %v1410 = vunpack.c.l.b16 %v514
        %v1411 = vunpack.c.l.b16 %v515
        %v1412 = vunpack.c.l.b16 %v516
        %v1413 = vunpack.c.l.b16 %v517
        %v1414 = vunpack.c.l.b16 %v518
        %v1415 = vunpack.c.l.b16 %v519
        %v1416 = vunpack.c.l.b16 %v520
        %v1417 = vunpack.c.l.b16 %v521
        %v1418 = vunpack.c.l.b16 %v522
        %v1419 = vunpack.c.l.b16 %v523
        %v1420 = vunpack.c.l.b16 %v524
        %v1421 = vunpack.c.l.b16 %v525
        %v1422 = vunpack.c.l.b16 %v526
        %v1423 = vunpack.c.l.b16 %v527
        %v1424 = vunpack.c.l.b16 %v528
        %v1425 = vunpack.c.l.b16 %v529
        %v1426 = vunpack.c.l.b16 %v530
        %v1427 = vunpack.c.l.b16 %v531
        %v1428 = vunpack.c.l.b16 %v532
        %v1429 = vunpack.c.l.b16 %v533
        %v1430 = vunpack.c.l.b16 %v534
        %v1431 = vunpack.c.l.b16 %v535
        %v1432 = vunpack.c.l.b16 %v536
        %v1433 = vunpack.c.l.b16 %v537
        %v1434 = vunpack.c.l.b16 %v538
        %v1435 = vunpack.c.l.b16 %v539
        %v1436 = vunpack.c.l.b16 %v540
        %v1437 = vunpack.c.l.b16 %v541
        %v1438 = vunpack.c.l.b16 %v542
        %v1439 = vunpack.c.l.b16 %v543
        %v1440 = vunpack.c.l.b16 %v544
        %v1441 = vunpack.c.l.b16 %v545
        %v1442 = vunpack.c.l.b16 %v546
        %v1443 = vunpack.c.l.b16 %v547
        %v1444 = vunpack.c.l.b16 %v548
        %v1445 = vunpack.c.l.b16 %v549
        %v1446 = vunpack.c.l.b16 %v550
        %v1447 = vunpack.c.l.b16 %v551
        %v1448 = vunpack.c.l.b16 %v552
        %v1449 = vunpack.c.l.b16 %v553
        %v1450 = vpack.c.b16 %v1323, %v1322
        %v1451 = vpack.c.b16 %v1325, %v1324
        %v1452 = vpack.c.b16 %v1327, %v1326
        %v1453 = vpack.c.b16 %v1329, %v1328
        %v1454 = vpack.c.b16 %v1331, %v1330
        %v1455 = vpack.c.b16 %v1333, %v1332
        %v1456 = vpack.c.b16 %v1335, %v1334
        %v1457 = vpack.c.b16 %v1337, %v1336
        %v1458 = vpack.c.b16 %v1339, %v1338
        %v1459 = vpack.c.b16 %v1341, %v1340
        %v1460 = vpack.c.b16 %v1343, %v1342
        %v1461 = vpack.c.b16 %v1345, %v1344
        %v1462 = vpack.c.b16 %v1347, %v1346
        %v1463 = vpack.c.b16 %v1349, %v1348
        %v1464 = vpack.c.b16 %v1351, %v1350
        %v1465 = vpack.c.b16 %v1353, %v1352
        %v1466 = vpack.c.b16 %v1355, %v1354
        %v1467 = vpack.c.b16 %v1357, %v1356
        %v1468 = vpack.c.b16 %v1359, %v1358
        %v1469 = vpack.c.b16 %v1361, %v1360
        %v1470 = vpack.c.b16 %v1363, %v1362
        %v1471 = vpack.c.b16 %v1365, %v1364
        %v1472 = vpack.c.b16 %v1367, %v1366
        %v1473 = vpack.c.b16 %v1369, %v1368
        %v1474 = vpack.c.b16 %v1371, %v1370
        %v1475 = vpack.c.b16 %v1373, %v1372
        %v1476 = vpack.c.b16 %v1375, %v1374
        %v1477 = vpack.c.b16 %v1377, %v1376
        %v1478 = vpack.c.b16 %v1379, %v1378
        %v1479 = vpack.c.b16 %v1381, %v1380
        %v1480 = vpack.c.b16 %v1383, %v1382
        %v1481 = vpack.c.b16 %v1385, %v1384
        %v1482 = vpack.c.b16 %v1387, %v1386
        %v1483 = vpack.c.b16 %v1389, %v1388
        %v1484 = vpack.c.b16 %v1391, %v1390
        %v1485 = vpack.c.b16 %v1393, %v1392
        %v1486 = vpack.c.b16 %v1395, %v1394
        %v1487 = vpack.c.b16 %v1397, %v1396
        %v1488 = vpack.c.b16 %v1399, %v1398
        %v1489 = vpack.c.b16 %v1401, %v1400
        %v1490 = vpack.c.b16 %v1403, %v1402
        %v1491 = vpack.c.b16 %v1405, %v1404
        %v1492 = vpack.c.b16 %v1407, %v1406
        %v1493 = vpack.c.b16 %v1409, %v1408
        %v1494 = vpack.c.b16 %v1411, %v1410
        %v1495 = vpack.c.b16 %v1413, %v1412
        %v1496 = vpack.c.b16 %v1415, %v1414
        %v1497 = vpack.c.b16 %v1417, %v1416
        %v1498 = vpack.c.b16 %v1419, %v1418
        %v1499 = vpack.c.b16 %v1421, %v1420
        %v1500 = vpack.c.b16 %v1423, %v1422
        %v1501 = vpack.c.b16 %v1425, %v1424
        %v1502 = vpack.c.b16 %v1427, %v1426
        %v1503 = vpack.c.b16 %v1429, %v1428
        %v1504 = vpack.c.b16 %v1431, %v1430
        %v1505 = vpack.c.b16 %v1433, %v1432
        %v1506 = vpack.c.b16 %v1435, %v1434
        %v1507 = vpack.c.b16 %v1437, %v1436
        %v1508 = vpack.c.b16 %v1439, %v1438
        %v1509 = vpack.c.b16 %v1441, %v1440
        %v1510 = vpack.c.b16 %v1443, %v1442
        %v1511 = vpack.c.b16 %v1445, %v1444
        %v1512 = vpack.c.b16 %v1447, %v1446
        %v1513 = vpack.c.b16 %v1449, %v1448
        %1578 = vmatprep.subr.bf16.mxu0 0
        %1579 = vmatpush1.bf16.msra.mxu0 %v1457
        %1580 = vmatprep.subr.bf16.mxu0 0
        %1581 = vmatpush1.bf16.msra.mxu0 %v1456
        %1582 = vmatprep.subr.bf16.mxu0 0
        %1583 = vmatpush1.bf16.msra.mxu0 %v1455
        %1584 = vmatprep.subr.bf16.mxu0 0
        %1585 = vmatpush1.bf16.msra.mxu0 %v1454
        %1586 = vmatprep.subr.bf16.mxu0 0
        %1587 = vmatpush1.bf16.msra.mxu0 %v1453
        %1588 = vmatprep.subr.bf16.mxu0 0
        %1589 = vmatpush1.bf16.msra.mxu0 %v1452
        %1590 = vmatprep.subr.bf16.mxu0 0
        %1591 = vmatpush1.bf16.msra.mxu0 %v1451
        %1592 = vmatprep.subr.bf16.mxu0 0
        %1593 = vmatpush1.bf16.msra.mxu0 %v1450
        %1594 = vmatprep.subr.bf16.mxu0 0
        %1595 = vmatpush2.bf16.msra.mxu0 %v1465
        %1596 = vmatprep.subr.bf16.mxu0 0
        %1597 = vmatpush2.bf16.msra.mxu0 %v1464
        %1598 = vmatprep.subr.bf16.mxu0 0
        %1599 = vmatpush2.bf16.msra.mxu0 %v1463
        %1600 = vmatprep.subr.bf16.mxu0 0
        %1601 = vmatpush2.bf16.msra.mxu0 %v1462
        %1602 = vmatprep.subr.bf16.mxu0 0
        %1603 = vmatpush2.bf16.msra.mxu0 %v1461
        %1604 = vmatprep.subr.bf16.mxu0 0
        %1605 = vmatpush2.bf16.msra.mxu0 %v1460
        %1606 = vmatprep.subr.bf16.mxu0 0
        %1607 = vmatpush2.bf16.msra.mxu0 %v1459
        %1608 = vmatprep.subr.bf16.mxu0 0
        %1609 = vmatpush2.bf16.msra.mxu0 %v1458
        %1610 = vmatprep.mubr.bf16.mxu0 %v939
        %1611 = vmatmul.mubr.bf16.gmra.mxu0 %v938
        %v1612 = vpop.f32.mrf.mxu0
        %v1613 = vadd.f32 0.0, %v1612
        %v1614 = vpop.f32.mrf.mxu0
        %v1615 = vpop.f32.mrf.mxu0
        %v1616 = vadd.f32 0.0, %v1615
        %v1617 = vpop.f32.mrf.mxu0
        %1618 = vmatprep.mubr.bf16.mxu0 %v947
        %1619 = vmatmul.mubr.bf16.gmra.mxu0 %v946
        %v1620 = vpop.f32.mrf.mxu0
        %v1621 = vadd.f32 0.0, %v1620
        %v1622 = vpop.f32.mrf.mxu0
        %v1623 = vpop.f32.mrf.mxu0
        %v1624 = vadd.f32 0.0, %v1623
        %v1625 = vpop.f32.mrf.mxu0
        %1626 = vmatprep.mubr.bf16.mxu0 %v955
        %1627 = vmatmul.mubr.bf16.gmra.mxu0 %v954
        %v1628 = vpop.f32.mrf.mxu0
        %v1629 = vadd.f32 0.0, %v1628
        %v1630 = vpop.f32.mrf.mxu0
        %v1631 = vpop.f32.mrf.mxu0
        %v1632 = vadd.f32 0.0, %v1631
        %v1633 = vpop.f32.mrf.mxu0
        %1634 = vmatprep.mubr.bf16.mxu0 %v963
        %1635 = vmatmul.mubr.bf16.gmra.mxu0 %v962
        %v1636 = vpop.f32.mrf.mxu0
        %v1637 = vadd.f32 0.0, %v1636
        %v1638 = vpop.f32.mrf.mxu0
        %v1639 = vpop.f32.mrf.mxu0
        %v1640 = vadd.f32 0.0, %v1639
        %v1641 = vpop.f32.mrf.mxu0
        %1642 = vmatprep.mubr.bf16.mxu0 %v971
        %1643 = vmatmul.mubr.bf16.gmra.mxu0 %v970
        %v1644 = vpop.f32.mrf.mxu0
        %v1645 = vadd.f32 0.0, %v1644
        %v1646 = vpop.f32.mrf.mxu0
        %v1647 = vpop.f32.mrf.mxu0
        %v1648 = vadd.f32 0.0, %v1647
        %v1649 = vpop.f32.mrf.mxu0
        %1650 = vmatprep.mubr.bf16.mxu0 %v979
        %1651 = vmatmul.mubr.bf16.gmra.mxu0 %v978
        %v1652 = vpop.f32.mrf.mxu0
        %v1653 = vadd.f32 0.0, %v1652
        %v1654 = vpop.f32.mrf.mxu0
        %v1655 = vpop.f32.mrf.mxu0
        %v1656 = vadd.f32 0.0, %v1655
        %v1657 = vpop.f32.mrf.mxu0
        %1658 = vmatprep.mubr.bf16.mxu0 %v987
        %1659 = vmatmul.mubr.bf16.gmra.mxu0 %v986
        %v1660 = vpop.f32.mrf.mxu0
        %v1661 = vadd.f32 0.0, %v1660
        %v1662 = vpop.f32.mrf.mxu0
        %v1663 = vpop.f32.mrf.mxu0
        %v1664 = vadd.f32 0.0, %v1663
        %v1665 = vpop.f32.mrf.mxu0
        %1666 = vmatprep.mubr.bf16.mxu0 %v995
        %1667 = vmatmul.mubr.bf16.gmra.mxu0 %v994
        %v1668 = vpop.f32.mrf.mxu0
        %v1669 = vadd.f32 0.0, %v1668
        %v1670 = vpop.f32.mrf.mxu0
        %v1671 = vpop.f32.mrf.mxu0
        %v1672 = vadd.f32 0.0, %v1671
        %v1673 = vpop.f32.mrf.mxu0
        %1674 = vmatprep.mubr.bf16.mxu0 %v1003
        %1675 = vmatmul.mubr.bf16.gmra.mxu0 %v1002
        %v1676 = vpop.f32.mrf.mxu0
        %v1677 = vadd.f32 0.0, %v1676
        %v1678 = vpop.f32.mrf.mxu0
        %v1679 = vpop.f32.mrf.mxu0
        %v1680 = vadd.f32 0.0, %v1679
        %v1681 = vpop.f32.mrf.mxu0
        %1682 = vmatprep.mubr.bf16.mxu0 %v1011
        %1683 = vmatmul.mubr.bf16.gmra.mxu0 %v1010
        %v1684 = vpop.f32.mrf.mxu0
        %v1685 = vadd.f32 0.0, %v1684
        %v1686 = vpop.f32.mrf.mxu0
        %v1687 = vpop.f32.mrf.mxu0
        %v1688 = vadd.f32 0.0, %v1687
        %v1689 = vpop.f32.mrf.mxu0
        %1690 = vmatprep.mubr.bf16.mxu0 %v1019
        %1691 = vmatmul.mubr.bf16.gmra.mxu0 %v1018
        %v1692 = vpop.f32.mrf.mxu0
        %v1693 = vadd.f32 0.0, %v1692
        %v1694 = vpop.f32.mrf.mxu0
        %v1695 = vpop.f32.mrf.mxu0
        %v1696 = vadd.f32 0.0, %v1695
        %v1697 = vpop.f32.mrf.mxu0
        %1698 = vmatprep.mubr.bf16.mxu0 %v1027
        %1699 = vmatmul.mubr.bf16.gmra.mxu0 %v1026
        %v1700 = vpop.f32.mrf.mxu0
        %v1701 = vadd.f32 0.0, %v1700
        %v1702 = vpop.f32.mrf.mxu0
        %v1703 = vpop.f32.mrf.mxu0
        %v1704 = vadd.f32 0.0, %v1703
        %v1705 = vpop.f32.mrf.mxu0
        %1706 = vmatprep.mubr.bf16.mxu0 %v1035
        %1707 = vmatmul.mubr.bf16.gmra.mxu0 %v1034
        %v1708 = vpop.f32.mrf.mxu0
        %v1709 = vadd.f32 0.0, %v1708
        %v1710 = vpop.f32.mrf.mxu0
        %v1711 = vpop.f32.mrf.mxu0
        %v1712 = vadd.f32 0.0, %v1711
        %v1713 = vpop.f32.mrf.mxu0
        %1714 = vmatprep.mubr.bf16.mxu0 %v1043
        %1715 = vmatmul.mubr.bf16.gmra.mxu0 %v1042
        %v1716 = vpop.f32.mrf.mxu0
        %v1717 = vadd.f32 0.0, %v1716
        %v1718 = vpop.f32.mrf.mxu0
        %v1719 = vpop.f32.mrf.mxu0
        %v1720 = vadd.f32 0.0, %v1719
        %v1721 = vpop.f32.mrf.mxu0
        %1722 = vmatprep.mubr.bf16.mxu0 %v1051
        %1723 = vmatmul.mubr.bf16.gmra.mxu0 %v1050
        %v1724 = vpop.f32.mrf.mxu0
        %v1725 = vadd.f32 0.0, %v1724
        %v1726 = vpop.f32.mrf.mxu0
        %v1727 = vpop.f32.mrf.mxu0
        %v1728 = vadd.f32 0.0, %v1727
        %v1729 = vpop.f32.mrf.mxu0
        %1730 = vmatprep.mubr.bf16.mxu0 %v1059
        %1731 = vmatmul.mubr.bf16.gmra.mxu0 %v1058
        %v1732 = vpop.f32.mrf.mxu0
        %v1733 = vadd.f32 0.0, %v1732
        %v1734 = vpop.f32.mrf.mxu0
        %v1735 = vpop.f32.mrf.mxu0
        %v1736 = vadd.f32 0.0, %v1735
        %v1737 = vpop.f32.mrf.mxu0
        %1738 = vdwg.mxu0
        %1739 = vmatprep.subr.bf16.mxu0 0
        %1740 = vmatpush1.bf16.msra.mxu0 %v1473
        %1741 = vmatprep.subr.bf16.mxu0 0
        %1742 = vmatpush1.bf16.msra.mxu0 %v1472
        %1743 = vmatprep.subr.bf16.mxu0 0
        %1744 = vmatpush1.bf16.msra.mxu0 %v1471
        %1745 = vmatprep.subr.bf16.mxu0 0
        %1746 = vmatpush1.bf16.msra.mxu0 %v1470
        %1747 = vmatprep.subr.bf16.mxu0 0
        %1748 = vmatpush1.bf16.msra.mxu0 %v1469
        %1749 = vmatprep.subr.bf16.mxu0 0
        %1750 = vmatpush1.bf16.msra.mxu0 %v1468
        %1751 = vmatprep.subr.bf16.mxu0 0
        %1752 = vmatpush1.bf16.msra.mxu0 %v1467
        %1753 = vmatprep.subr.bf16.mxu0 0
        %1754 = vmatpush1.bf16.msra.mxu0 %v1466
        %1755 = vmatprep.subr.bf16.mxu0 0
        %1756 = vmatpush2.bf16.msra.mxu0 %v1481
        %1757 = vmatprep.subr.bf16.mxu0 0
        %1758 = vmatpush2.bf16.msra.mxu0 %v1480
        %1759 = vmatprep.subr.bf16.mxu0 0
        %1760 = vmatpush2.bf16.msra.mxu0 %v1479
        %1761 = vmatprep.subr.bf16.mxu0 0
        %1762 = vmatpush2.bf16.msra.mxu0 %v1478
        %1763 = vmatprep.subr.bf16.mxu0 0
        %1764 = vmatpush2.bf16.msra.mxu0 %v1477
        %1765 = vmatprep.subr.bf16.mxu0 0
        %1766 = vmatpush2.bf16.msra.mxu0 %v1476
        %1767 = vmatprep.subr.bf16.mxu0 0
        %1768 = vmatpush2.bf16.msra.mxu0 %v1475
        %1769 = vmatprep.subr.bf16.mxu0 0
        %1770 = vmatpush2.bf16.msra.mxu0 %v1474
        %1771 = vmatprep.mubr.bf16.mxu0 %v941
        %1772 = vmatmul.mubr.bf16.gmra.mxu0 %v940
        %v1773 = vpop.f32.mrf.mxu0
        %v1774 = vadd.f32 %v1613, %v1773
        %v1775 = vpop.f32.mrf.mxu0
        %v1776 = vpop.f32.mrf.mxu0
        %v1777 = vadd.f32 %v1616, %v1776
        %v1778 = vpop.f32.mrf.mxu0
        %1779 = vmatprep.mubr.bf16.mxu0 %v949
        %1780 = vmatmul.mubr.bf16.gmra.mxu0 %v948
        %v1781 = vpop.f32.mrf.mxu0
        %v1782 = vadd.f32 %v1621, %v1781
        %v1783 = vpop.f32.mrf.mxu0
        %v1784 = vpop.f32.mrf.mxu0
        %v1785 = vadd.f32 %v1624, %v1784
        %v1786 = vpop.f32.mrf.mxu0
        %1787 = vmatprep.mubr.bf16.mxu0 %v957
        %1788 = vmatmul.mubr.bf16.gmra.mxu0 %v956
        %v1789 = vpop.f32.mrf.mxu0
        %v1790 = vadd.f32 %v1629, %v1789
        %v1791 = vpop.f32.mrf.mxu0
        %v1792 = vpop.f32.mrf.mxu0
        %v1793 = vadd.f32 %v1632, %v1792
        %v1794 = vpop.f32.mrf.mxu0
        %1795 = vmatprep.mubr.bf16.mxu0 %v965
        %1796 = vmatmul.mubr.bf16.gmra.mxu0 %v964
        %v1797 = vpop.f32.mrf.mxu0
        %v1798 = vadd.f32 %v1637, %v1797
        %v1799 = vpop.f32.mrf.mxu0
        %v1800 = vpop.f32.mrf.mxu0
        %v1801 = vadd.f32 %v1640, %v1800
        %v1802 = vpop.f32.mrf.mxu0
        %1803 = vmatprep.mubr.bf16.mxu0 %v973
        %1804 = vmatmul.mubr.bf16.gmra.mxu0 %v972
        %v1805 = vpop.f32.mrf.mxu0
        %v1806 = vadd.f32 %v1645, %v1805
        %v1807 = vpop.f32.mrf.mxu0
        %v1808 = vpop.f32.mrf.mxu0
        %v1809 = vadd.f32 %v1648, %v1808
        %v1810 = vpop.f32.mrf.mxu0
        %1811 = vmatprep.mubr.bf16.mxu0 %v981
        %1812 = vmatmul.mubr.bf16.gmra.mxu0 %v980
        %v1813 = vpop.f32.mrf.mxu0
        %v1814 = vadd.f32 %v1653, %v1813
        %v1815 = vpop.f32.mrf.mxu0
        %v1816 = vpop.f32.mrf.mxu0
        %v1817 = vadd.f32 %v1656, %v1816
        %v1818 = vpop.f32.mrf.mxu0
        %1819 = vmatprep.mubr.bf16.mxu0 %v989
        %1820 = vmatmul.mubr.bf16.gmra.mxu0 %v988
        %v1821 = vpop.f32.mrf.mxu0
        %v1822 = vadd.f32 %v1661, %v1821
        %v1823 = vpop.f32.mrf.mxu0
        %v1824 = vpop.f32.mrf.mxu0
        %v1825 = vadd.f32 %v1664, %v1824
        %v1826 = vpop.f32.mrf.mxu0
        %1827 = vmatprep.mubr.bf16.mxu0 %v997
        %1828 = vmatmul.mubr.bf16.gmra.mxu0 %v996
        %v1829 = vpop.f32.mrf.mxu0
        %v1830 = vadd.f32 %v1669, %v1829
        %v1831 = vpop.f32.mrf.mxu0
        %v1832 = vpop.f32.mrf.mxu0
        %v1833 = vadd.f32 %v1672, %v1832
        %v1834 = vpop.f32.mrf.mxu0
        %1835 = vmatprep.mubr.bf16.mxu0 %v1005
        %1836 = vmatmul.mubr.bf16.gmra.mxu0 %v1004
        %v1837 = vpop.f32.mrf.mxu0
        %v1838 = vadd.f32 %v1677, %v1837
        %v1839 = vpop.f32.mrf.mxu0
        %v1840 = vpop.f32.mrf.mxu0
        %v1841 = vadd.f32 %v1680, %v1840
        %v1842 = vpop.f32.mrf.mxu0
        %1843 = vmatprep.mubr.bf16.mxu0 %v1013
        %1844 = vmatmul.mubr.bf16.gmra.mxu0 %v1012
        %v1845 = vpop.f32.mrf.mxu0
        %v1846 = vadd.f32 %v1685, %v1845
        %v1847 = vpop.f32.mrf.mxu0
        %v1848 = vpop.f32.mrf.mxu0
        %v1849 = vadd.f32 %v1688, %v1848
        %v1850 = vpop.f32.mrf.mxu0
        %1851 = vmatprep.mubr.bf16.mxu0 %v1021
        %1852 = vmatmul.mubr.bf16.gmra.mxu0 %v1020
        %v1853 = vpop.f32.mrf.mxu0
        %v1854 = vadd.f32 %v1693, %v1853
        %v1855 = vpop.f32.mrf.mxu0
        %v1856 = vpop.f32.mrf.mxu0
        %v1857 = vadd.f32 %v1696, %v1856
        %v1858 = vpop.f32.mrf.mxu0
        %1859 = vmatprep.mubr.bf16.mxu0 %v1029
        %1860 = vmatmul.mubr.bf16.gmra.mxu0 %v1028
        %v1861 = vpop.f32.mrf.mxu0
        %v1862 = vadd.f32 %v1701, %v1861
        %v1863 = vpop.f32.mrf.mxu0
        %v1864 = vpop.f32.mrf.mxu0
        %v1865 = vadd.f32 %v1704, %v1864
        %v1866 = vpop.f32.mrf.mxu0
        %1867 = vmatprep.mubr.bf16.mxu0 %v1037
        %1868 = vmatmul.mubr.bf16.gmra.mxu0 %v1036
        %v1869 = vpop.f32.mrf.mxu0
        %v1870 = vadd.f32 %v1709, %v1869
        %v1871 = vpop.f32.mrf.mxu0
        %v1872 = vpop.f32.mrf.mxu0
        %v1873 = vadd.f32 %v1712, %v1872
        %v1874 = vpop.f32.mrf.mxu0
        %1875 = vmatprep.mubr.bf16.mxu0 %v1045
        %1876 = vmatmul.mubr.bf16.gmra.mxu0 %v1044
        %v1877 = vpop.f32.mrf.mxu0
        %v1878 = vadd.f32 %v1717, %v1877
        %v1879 = vpop.f32.mrf.mxu0
        %v1880 = vpop.f32.mrf.mxu0
        %v1881 = vadd.f32 %v1720, %v1880
        %v1882 = vpop.f32.mrf.mxu0
        %1883 = vmatprep.mubr.bf16.mxu0 %v1053
        %1884 = vmatmul.mubr.bf16.gmra.mxu0 %v1052
        %v1885 = vpop.f32.mrf.mxu0
        %v1886 = vadd.f32 %v1725, %v1885
        %v1887 = vpop.f32.mrf.mxu0
        %v1888 = vpop.f32.mrf.mxu0
        %v1889 = vadd.f32 %v1728, %v1888
        %v1890 = vpop.f32.mrf.mxu0
        %1891 = vmatprep.mubr.bf16.mxu0 %v1061
        %1892 = vmatmul.mubr.bf16.gmra.mxu0 %v1060
        %v1893 = vpop.f32.mrf.mxu0
        %v1894 = vadd.f32 %v1733, %v1893
        %v1895 = vpop.f32.mrf.mxu0
        %v1896 = vpop.f32.mrf.mxu0
        %v1897 = vadd.f32 %v1736, %v1896
        %v1898 = vpop.f32.mrf.mxu0
        %1899 = vdwg.mxu0
        %1900 = vmatprep.subr.bf16.mxu0 0
        %1901 = vmatpush1.bf16.msra.mxu0 %v1489
        %1902 = vmatprep.subr.bf16.mxu0 0
        %1903 = vmatpush1.bf16.msra.mxu0 %v1488
        %1904 = vmatprep.subr.bf16.mxu0 0
        %1905 = vmatpush1.bf16.msra.mxu0 %v1487
        %1906 = vmatprep.subr.bf16.mxu0 0
        %1907 = vmatpush1.bf16.msra.mxu0 %v1486
        %1908 = vmatprep.subr.bf16.mxu0 0
        %1909 = vmatpush1.bf16.msra.mxu0 %v1485
        %1910 = vmatprep.subr.bf16.mxu0 0
        %1911 = vmatpush1.bf16.msra.mxu0 %v1484
        %1912 = vmatprep.subr.bf16.mxu0 0
        %1913 = vmatpush1.bf16.msra.mxu0 %v1483
        %1914 = vmatprep.subr.bf16.mxu0 0
        %1915 = vmatpush1.bf16.msra.mxu0 %v1482
        %1916 = vmatprep.subr.bf16.mxu0 0
        %1917 = vmatpush2.bf16.msra.mxu0 %v1497
        %1918 = vmatprep.subr.bf16.mxu0 0
        %1919 = vmatpush2.bf16.msra.mxu0 %v1496
        %1920 = vmatprep.subr.bf16.mxu0 0
        %1921 = vmatpush2.bf16.msra.mxu0 %v1495
        %1922 = vmatprep.subr.bf16.mxu0 0
        %1923 = vmatpush2.bf16.msra.mxu0 %v1494
        %1924 = vmatprep.subr.bf16.mxu0 0
        %1925 = vmatpush2.bf16.msra.mxu0 %v1493
        %1926 = vmatprep.subr.bf16.mxu0 0
        %1927 = vmatpush2.bf16.msra.mxu0 %v1492
        %1928 = vmatprep.subr.bf16.mxu0 0
        %1929 = vmatpush2.bf16.msra.mxu0 %v1491
        %1930 = vmatprep.subr.bf16.mxu0 0
        %1931 = vmatpush2.bf16.msra.mxu0 %v1490
        %1932 = vmatprep.mubr.bf16.mxu0 %v943
        %1933 = vmatmul.mubr.bf16.gmra.mxu0 %v942
        %v1934 = vpop.f32.mrf.mxu0
        %v1935 = vadd.f32 %v1774, %v1934
        %v1936 = vpop.f32.mrf.mxu0
        %v1937 = vpop.f32.mrf.mxu0
        %v1938 = vadd.f32 %v1777, %v1937
        %v1939 = vpop.f32.mrf.mxu0
        %1940 = vmatprep.mubr.bf16.mxu0 %v951
        %1941 = vmatmul.mubr.bf16.gmra.mxu0 %v950
        %v1942 = vpop.f32.mrf.mxu0
        %v1943 = vadd.f32 %v1782, %v1942
        %v1944 = vpop.f32.mrf.mxu0
        %v1945 = vpop.f32.mrf.mxu0
        %v1946 = vadd.f32 %v1785, %v1945
        %v1947 = vpop.f32.mrf.mxu0
        %1948 = vmatprep.mubr.bf16.mxu0 %v959
        %1949 = vmatmul.mubr.bf16.gmra.mxu0 %v958
        %v1950 = vpop.f32.mrf.mxu0
        %v1951 = vadd.f32 %v1790, %v1950
        %v1952 = vpop.f32.mrf.mxu0
        %v1953 = vpop.f32.mrf.mxu0
        %v1954 = vadd.f32 %v1793, %v1953
        %v1955 = vpop.f32.mrf.mxu0
        %1956 = vmatprep.mubr.bf16.mxu0 %v967
        %1957 = vmatmul.mubr.bf16.gmra.mxu0 %v966
        %v1958 = vpop.f32.mrf.mxu0
        %v1959 = vadd.f32 %v1798, %v1958
        %v1960 = vpop.f32.mrf.mxu0
        %v1961 = vpop.f32.mrf.mxu0
        %v1962 = vadd.f32 %v1801, %v1961
        %v1963 = vpop.f32.mrf.mxu0
        %1964 = vmatprep.mubr.bf16.mxu0 %v975
        %1965 = vmatmul.mubr.bf16.gmra.mxu0 %v974
        %v1966 = vpop.f32.mrf.mxu0
        %v1967 = vadd.f32 %v1806, %v1966
        %v1968 = vpop.f32.mrf.mxu0
        %v1969 = vpop.f32.mrf.mxu0
        %v1970 = vadd.f32 %v1809, %v1969
        %v1971 = vpop.f32.mrf.mxu0
        %1972 = vmatprep.mubr.bf16.mxu0 %v983
        %1973 = vmatmul.mubr.bf16.gmra.mxu0 %v982
        %v1974 = vpop.f32.mrf.mxu0
        %v1975 = vadd.f32 %v1814, %v1974
        %v1976 = vpop.f32.mrf.mxu0
        %v1977 = vpop.f32.mrf.mxu0
        %v1978 = vadd.f32 %v1817, %v1977
        %v1979 = vpop.f32.mrf.mxu0
        %1980 = vmatprep.mubr.bf16.mxu0 %v991
        %1981 = vmatmul.mubr.bf16.gmra.mxu0 %v990
        %v1982 = vpop.f32.mrf.mxu0
        %v1983 = vadd.f32 %v1822, %v1982
        %v1984 = vpop.f32.mrf.mxu0
        %v1985 = vpop.f32.mrf.mxu0
        %v1986 = vadd.f32 %v1825, %v1985
        %v1987 = vpop.f32.mrf.mxu0
        %1988 = vmatprep.mubr.bf16.mxu0 %v999
        %1989 = vmatmul.mubr.bf16.gmra.mxu0 %v998
        %v1990 = vpop.f32.mrf.mxu0
        %v1991 = vadd.f32 %v1830, %v1990
        %v1992 = vpop.f32.mrf.mxu0
        %v1993 = vpop.f32.mrf.mxu0
        %v1994 = vadd.f32 %v1833, %v1993
        %v1995 = vpop.f32.mrf.mxu0
        %1996 = vmatprep.mubr.bf16.mxu0 %v1007
        %1997 = vmatmul.mubr.bf16.gmra.mxu0 %v1006
        %v1998 = vpop.f32.mrf.mxu0
        %v1999 = vadd.f32 %v1838, %v1998
        %v2000 = vpop.f32.mrf.mxu0
        %v2001 = vpop.f32.mrf.mxu0
        %v2002 = vadd.f32 %v1841, %v2001
        %v2003 = vpop.f32.mrf.mxu0
        %2004 = vmatprep.mubr.bf16.mxu0 %v1015
        %2005 = vmatmul.mubr.bf16.gmra.mxu0 %v1014
        %v2006 = vpop.f32.mrf.mxu0
        %v2007 = vadd.f32 %v1846, %v2006
        %v2008 = vpop.f32.mrf.mxu0
        %v2009 = vpop.f32.mrf.mxu0
        %v2010 = vadd.f32 %v1849, %v2009
        %v2011 = vpop.f32.mrf.mxu0
        %2012 = vmatprep.mubr.bf16.mxu0 %v1023
        %2013 = vmatmul.mubr.bf16.gmra.mxu0 %v1022
        %v2014 = vpop.f32.mrf.mxu0
        %v2015 = vadd.f32 %v1854, %v2014
        %v2016 = vpop.f32.mrf.mxu0
        %v2017 = vpop.f32.mrf.mxu0
        %v2018 = vadd.f32 %v1857, %v2017
        %v2019 = vpop.f32.mrf.mxu0
        %2020 = vmatprep.mubr.bf16.mxu0 %v1031
        %2021 = vmatmul.mubr.bf16.gmra.mxu0 %v1030
        %v2022 = vpop.f32.mrf.mxu0
        %v2023 = vadd.f32 %v1862, %v2022
        %v2024 = vpop.f32.mrf.mxu0
        %v2025 = vpop.f32.mrf.mxu0
        %v2026 = vadd.f32 %v1865, %v2025
        %v2027 = vpop.f32.mrf.mxu0
        %2028 = vmatprep.mubr.bf16.mxu0 %v1039
        %2029 = vmatmul.mubr.bf16.gmra.mxu0 %v1038
        %v2030 = vpop.f32.mrf.mxu0
        %v2031 = vadd.f32 %v1870, %v2030
        %v2032 = vpop.f32.mrf.mxu0
        %v2033 = vpop.f32.mrf.mxu0
        %v2034 = vadd.f32 %v1873, %v2033
        %v2035 = vpop.f32.mrf.mxu0
        %2036 = vmatprep.mubr.bf16.mxu0 %v1047
        %2037 = vmatmul.mubr.bf16.gmra.mxu0 %v1046
        %v2038 = vpop.f32.mrf.mxu0
        %v2039 = vadd.f32 %v1878, %v2038
        %v2040 = vpop.f32.mrf.mxu0
        %v2041 = vpop.f32.mrf.mxu0
        %v2042 = vadd.f32 %v1881, %v2041
        %v2043 = vpop.f32.mrf.mxu0
        %2044 = vmatprep.mubr.bf16.mxu0 %v1055
        %2045 = vmatmul.mubr.bf16.gmra.mxu0 %v1054
        %v2046 = vpop.f32.mrf.mxu0
        %v2047 = vadd.f32 %v1886, %v2046
        %v2048 = vpop.f32.mrf.mxu0
        %v2049 = vpop.f32.mrf.mxu0
        %v2050 = vadd.f32 %v1889, %v2049
        %v2051 = vpop.f32.mrf.mxu0
        %2052 = vmatprep.mubr.bf16.mxu0 %v1063
        %2053 = vmatmul.mubr.bf16.gmra.mxu0 %v1062
        %v2054 = vpop.f32.mrf.mxu0
        %v2055 = vadd.f32 %v1894, %v2054
        %v2056 = vpop.f32.mrf.mxu0
        %v2057 = vpop.f32.mrf.mxu0
        %v2058 = vadd.f32 %v1897, %v2057
        %v2059 = vpop.f32.mrf.mxu0
        %2060 = vdwg.mxu0
        %2061 = vmatprep.subr.bf16.mxu0 0
        %2062 = vmatpush1.bf16.msra.mxu0 %v1505
        %2063 = vmatprep.subr.bf16.mxu0 0
        %2064 = vmatpush1.bf16.msra.mxu0 %v1504
        %2065 = vmatprep.subr.bf16.mxu0 0
        %2066 = vmatpush1.bf16.msra.mxu0 %v1503
        %2067 = vmatprep.subr.bf16.mxu0 0
        %2068 = vmatpush1.bf16.msra.mxu0 %v1502
        %2069 = vmatprep.subr.bf16.mxu0 0
        %2070 = vmatpush1.bf16.msra.mxu0 %v1501
        %2071 = vmatprep.subr.bf16.mxu0 0
        %2072 = vmatpush1.bf16.msra.mxu0 %v1500
        %2073 = vmatprep.subr.bf16.mxu0 0
        %2074 = vmatpush1.bf16.msra.mxu0 %v1499
        %2075 = vmatprep.subr.bf16.mxu0 0
        %2076 = vmatpush1.bf16.msra.mxu0 %v1498
        %2077 = vmatprep.subr.bf16.mxu0 0
        %2078 = vmatpush2.bf16.msra.mxu0 %v1513
        %2079 = vmatprep.subr.bf16.mxu0 0
        %2080 = vmatpush2.bf16.msra.mxu0 %v1512
        %2081 = vmatprep.subr.bf16.mxu0 0
        %2082 = vmatpush2.bf16.msra.mxu0 %v1511
        %2083 = vmatprep.subr.bf16.mxu0 0
        %2084 = vmatpush2.bf16.msra.mxu0 %v1510
        %2085 = vmatprep.subr.bf16.mxu0 0
        %2086 = vmatpush2.bf16.msra.mxu0 %v1509
        %2087 = vmatprep.subr.bf16.mxu0 0
        %2088 = vmatpush2.bf16.msra.mxu0 %v1508
        %2089 = vmatprep.subr.bf16.mxu0 0
        %2090 = vmatpush2.bf16.msra.mxu0 %v1507
        %2091 = vmatprep.subr.bf16.mxu0 0
        %2092 = vmatpush2.bf16.msra.mxu0 %v1506
        %2093 = vmatprep.mubr.bf16.mxu0 %v945
        %2094 = vmatmul.mubr.bf16.gmra.mxu0 %v944
        %v2095 = vpop.f32.mrf.mxu0
        %v2096 = vadd.f32 %v1935, %v2095
        %v2097 = vpop.f32.mrf.mxu0
        %v2098 = vpop.f32.mrf.mxu0
        %v2099 = vadd.f32 %v1938, %v2098
        %v2100 = vpop.f32.mrf.mxu0
        %2101 = vmatprep.mubr.bf16.mxu0 %v953
        %2102 = vmatmul.mubr.bf16.gmra.mxu0 %v952
        %v2103 = vpop.f32.mrf.mxu0
        %v2104 = vadd.f32 %v1943, %v2103
        %v2105 = vpop.f32.mrf.mxu0
        %v2106 = vpop.f32.mrf.mxu0
        %v2107 = vadd.f32 %v1946, %v2106
        %v2108 = vpop.f32.mrf.mxu0
        %2109 = vmatprep.mubr.bf16.mxu0 %v961
        %2110 = vmatmul.mubr.bf16.gmra.mxu0 %v960
        %v2111 = vpop.f32.mrf.mxu0
        %v2112 = vadd.f32 %v1951, %v2111
        %v2113 = vpop.f32.mrf.mxu0
        %v2114 = vpop.f32.mrf.mxu0
        %v2115 = vadd.f32 %v1954, %v2114
        %v2116 = vpop.f32.mrf.mxu0
        %2117 = vmatprep.mubr.bf16.mxu0 %v969
        %2118 = vmatmul.mubr.bf16.gmra.mxu0 %v968
        %v2119 = vpop.f32.mrf.mxu0
        %v2120 = vadd.f32 %v1959, %v2119
        %v2121 = vpop.f32.mrf.mxu0
        %v2122 = vpop.f32.mrf.mxu0
        %v2123 = vadd.f32 %v1962, %v2122
        %v2124 = vpop.f32.mrf.mxu0
        %2125 = vmatprep.mubr.bf16.mxu0 %v977
        %2126 = vmatmul.mubr.bf16.gmra.mxu0 %v976
        %v2127 = vpop.f32.mrf.mxu0
        %v2128 = vadd.f32 %v1967, %v2127
        %v2129 = vpop.f32.mrf.mxu0
        %v2130 = vpop.f32.mrf.mxu0
        %v2131 = vadd.f32 %v1970, %v2130
        %v2132 = vpop.f32.mrf.mxu0
        %2133 = vmatprep.mubr.bf16.mxu0 %v985
        %2134 = vmatmul.mubr.bf16.gmra.mxu0 %v984
        %v2135 = vpop.f32.mrf.mxu0
        %v2136 = vadd.f32 %v1975, %v2135
        %v2137 = vpop.f32.mrf.mxu0
        %v2138 = vpop.f32.mrf.mxu0
        %v2139 = vadd.f32 %v1978, %v2138
        %v2140 = vpop.f32.mrf.mxu0
        %2141 = vmatprep.mubr.bf16.mxu0 %v993
        %2142 = vmatmul.mubr.bf16.gmra.mxu0 %v992
        %v2143 = vpop.f32.mrf.mxu0
        %v2144 = vadd.f32 %v1983, %v2143
        %v2145 = vpop.f32.mrf.mxu0
        %v2146 = vpop.f32.mrf.mxu0
        %v2147 = vadd.f32 %v1986, %v2146
        %v2148 = vpop.f32.mrf.mxu0
        %2149 = vmatprep.mubr.bf16.mxu0 %v1001
        %2150 = vmatmul.mubr.bf16.gmra.mxu0 %v1000
        %v2151 = vpop.f32.mrf.mxu0
        %v2152 = vadd.f32 %v1991, %v2151
        %v2153 = vpop.f32.mrf.mxu0
        %v2154 = vpop.f32.mrf.mxu0
        %v2155 = vadd.f32 %v1994, %v2154
        %v2156 = vpop.f32.mrf.mxu0
        %2157 = vmatprep.mubr.bf16.mxu0 %v1009
        %2158 = vmatmul.mubr.bf16.gmra.mxu0 %v1008
        %v2159 = vpop.f32.mrf.mxu0
        %v2160 = vadd.f32 %v1999, %v2159
        %v2161 = vpop.f32.mrf.mxu0
        %v2162 = vpop.f32.mrf.mxu0
        %v2163 = vadd.f32 %v2002, %v2162
        %v2164 = vpop.f32.mrf.mxu0
        %2165 = vmatprep.mubr.bf16.mxu0 %v1017
        %2166 = vmatmul.mubr.bf16.gmra.mxu0 %v1016
        %v2167 = vpop.f32.mrf.mxu0
        %v2168 = vadd.f32 %v2007, %v2167
        %v2169 = vpop.f32.mrf.mxu0
        %v2170 = vpop.f32.mrf.mxu0
        %v2171 = vadd.f32 %v2010, %v2170
        %v2172 = vpop.f32.mrf.mxu0
        %2173 = vmatprep.mubr.bf16.mxu0 %v1025
        %2174 = vmatmul.mubr.bf16.gmra.mxu0 %v1024
        %v2175 = vpop.f32.mrf.mxu0
        %v2176 = vadd.f32 %v2015, %v2175
        %v2177 = vpop.f32.mrf.mxu0
        %v2178 = vpop.f32.mrf.mxu0
        %v2179 = vadd.f32 %v2018, %v2178
        %v2180 = vpop.f32.mrf.mxu0
        %2181 = vmatprep.mubr.bf16.mxu0 %v1033
        %2182 = vmatmul.mubr.bf16.gmra.mxu0 %v1032
        %v2183 = vpop.f32.mrf.mxu0
        %v2184 = vadd.f32 %v2023, %v2183
        %v2185 = vpop.f32.mrf.mxu0
        %v2186 = vpop.f32.mrf.mxu0
        %v2187 = vadd.f32 %v2026, %v2186
        %v2188 = vpop.f32.mrf.mxu0
        %2189 = vmatprep.mubr.bf16.mxu0 %v1041
        %2190 = vmatmul.mubr.bf16.gmra.mxu0 %v1040
        %v2191 = vpop.f32.mrf.mxu0
        %v2192 = vadd.f32 %v2031, %v2191
        %v2193 = vpop.f32.mrf.mxu0
        %v2194 = vpop.f32.mrf.mxu0
        %v2195 = vadd.f32 %v2034, %v2194
        %v2196 = vpop.f32.mrf.mxu0
        %2197 = vmatprep.mubr.bf16.mxu0 %v1049
        %2198 = vmatmul.mubr.bf16.gmra.mxu0 %v1048
        %v2199 = vpop.f32.mrf.mxu0
        %v2200 = vadd.f32 %v2039, %v2199
        %v2201 = vpop.f32.mrf.mxu0
        %v2202 = vpop.f32.mrf.mxu0
        %v2203 = vadd.f32 %v2042, %v2202
        %v2204 = vpop.f32.mrf.mxu0
        %2205 = vmatprep.mubr.bf16.mxu0 %v1057
        %2206 = vmatmul.mubr.bf16.gmra.mxu0 %v1056
        %v2207 = vpop.f32.mrf.mxu0
        %v2208 = vadd.f32 %v2047, %v2207
        %v2209 = vpop.f32.mrf.mxu0
        %v2210 = vpop.f32.mrf.mxu0
        %v2211 = vadd.f32 %v2050, %v2210
        %v2212 = vpop.f32.mrf.mxu0
        %2213 = vmatprep.mubr.bf16.mxu0 %v1065
        %2214 = vmatmul.mubr.bf16.gmra.mxu0 %v1064
        %v2215 = vpop.f32.mrf.mxu0
        %v2216 = vadd.f32 %v2055, %v2215
        %v2217 = vpop.f32.mrf.mxu0
        %v2218 = vpop.f32.mrf.mxu0
        %v2219 = vadd.f32 %v2058, %v2218
        %v2220 = vpop.f32.mrf.mxu0
        %2221 = vdwg.mxu0
        %v2222 = vadd.f32 %v262, %v2096
        %v2223 = vadd.f32 %v263, %v2099
        %v2224 = vadd.f32 %v264, %v2104
        %v2225 = vadd.f32 %v265, %v2107
        %v2226 = vadd.f32 %v266, %v2112
        %v2227 = vadd.f32 %v267, %v2115
        %v2228 = vadd.f32 %v268, %v2120
        %v2229 = vadd.f32 %v269, %v2123
        %v2230 = vadd.f32 %v270, %v2128
        %v2231 = vadd.f32 %v271, %v2131
        %v2232 = vadd.f32 %v272, %v2136
        %v2233 = vadd.f32 %v273, %v2139
        %v2234 = vadd.f32 %v274, %v2144
        %v2235 = vadd.f32 %v275, %v2147
        %v2236 = vadd.f32 %v276, %v2152
        %v2237 = vadd.f32 %v277, %v2155
        %v2238 = vadd.f32 %v278, %v2160
        %v2239 = vadd.f32 %v279, %v2163
        %v2240 = vadd.f32 %v280, %v2168
        %v2241 = vadd.f32 %v281, %v2171
        %v2242 = vadd.f32 %v282, %v2176
        %v2243 = vadd.f32 %v283, %v2179
        %v2244 = vadd.f32 %v284, %v2184
        %v2245 = vadd.f32 %v285, %v2187
        %v2246 = vadd.f32 %v286, %v2192
        %v2247 = vadd.f32 %v287, %v2195
        %v2248 = vadd.f32 %v288, %v2200
        %v2249 = vadd.f32 %v289, %v2203
        %v2250 = vadd.f32 %v290, %v2208
        %v2251 = vadd.f32 %v291, %v2211
        %v2252 = vadd.f32 %v292, %v2216
        %v2253 = vadd.f32 %v293, %v2219
        %2254 = vst [vmem:[#allocation2] sm:$0xff] %v2222
        %2255 = vst [vmem:[#allocation2 + $0x8] sm:$0xff] %v2223
        %2256 = vst [vmem:[#allocation2 + $0x10] sm:$0xff] %v2224
        %2257 = vst [vmem:[#allocation2 + $0x18] sm:$0xff] %v2225
        %2258 = vst [vmem:[#allocation2 + $0x20] sm:$0xff] %v2226
        %2259 = vst [vmem:[#allocation2 + $0x28] sm:$0xff] %v2227
        %2260 = vst [vmem:[#allocation2 + $0x30] sm:$0xff] %v2228
        %2261 = vst [vmem:[#allocation2 + $0x38] sm:$0xff] %v2229
        %2262 = vst [vmem:[#allocation2 + $0x40] sm:$0xff] %v2230
        %2263 = vst [vmem:[#allocation2 + $0x48] sm:$0xff] %v2231
        %2264 = vst [vmem:[#allocation2 + $0x50] sm:$0xff] %v2232
        %2265 = vst [vmem:[#allocation2 + $0x58] sm:$0xff] %v2233
        %2266 = vst [vmem:[#allocation2 + $0x60] sm:$0xff] %v2234
        %2267 = vst [vmem:[#allocation2 + $0x68] sm:$0xff] %v2235
        %2268 = vst [vmem:[#allocation2 + $0x70] sm:$0xff] %v2236
        %2269 = vst [vmem:[#allocation2 + $0x78] sm:$0xff] %v2237
        %2270 = vst [vmem:[#allocation2 + $0x80] sm:$0xff] %v2238
        %2271 = vst [vmem:[#allocation2 + $0x88] sm:$0xff] %v2239
        %2272 = vst [vmem:[#allocation2 + $0x90] sm:$0xff] %v2240
        %2273 = vst [vmem:[#allocation2 + $0x98] sm:$0xff] %v2241
        %2274 = vst [vmem:[#allocation2 + $0xa0] sm:$0xff] %v2242
        %2275 = vst [vmem:[#allocation2 + $0xa8] sm:$0xff] %v2243
        %2276 = vst [vmem:[#allocation2 + $0xb0] sm:$0xff] %v2244
        %2277 = vst [vmem:[#allocation2 + $0xb8] sm:$0xff] %v2245
        %2278 = vst [vmem:[#allocation2 + $0xc0] sm:$0xff] %v2246
        %2279 = vst [vmem:[#allocation2 + $0xc8] sm:$0xff] %v2247
        %2280 = vst [vmem:[#allocation2 + $0xd0] sm:$0xff] %v2248
        %2281 = vst [vmem:[#allocation2 + $0xd8] sm:$0xff] %v2249
        %2282 = vst [vmem:[#allocation2 + $0xe0] sm:$0xff] %v2250
        %2283 = vst [vmem:[#allocation2 + $0xe8] sm:$0xff] %v2251
        %2284 = vst [vmem:[#allocation2 + $0xf0] sm:$0xff] %v2252
        %2285 = vst [vmem:[#allocation2 + $0xf8] sm:$0xff] %v2253
        // Predicated region
        $region45: #{tpu_custom_call.1} parent=31 // pred_check
          %p2286 = pneg %p225
        $region46: #{tpu_custom_call.1} parent=31 // pred_check_branch
          %2288 = sbr.rel (%p2286) target = $region48
        $region47: #{tpu_custom_call.1} parent=31 // pred_region
          %v2289 = vld [vmem:[#allocation2] sm:$0xff]
          %v2290 = vld [vmem:[#allocation2 + $0x8] sm:$0xff]
          %v2291 = vld [vmem:[#allocation2 + $0x10] sm:$0xff]
          %v2292 = vld [vmem:[#allocation2 + $0x18] sm:$0xff]
          %v2293 = vld [vmem:[#allocation2 + $0x20] sm:$0xff]
          %v2294 = vld [vmem:[#allocation2 + $0x28] sm:$0xff]
          %v2295 = vld [vmem:[#allocation2 + $0x30] sm:$0xff]
          %v2296 = vld [vmem:[#allocation2 + $0x38] sm:$0xff]
          %v2297 = vld [vmem:[#allocation2 + $0x40] sm:$0xff]
          %v2298 = vld [vmem:[#allocation2 + $0x48] sm:$0xff]
          %v2299 = vld [vmem:[#allocation2 + $0x50] sm:$0xff]
          %v2300 = vld [vmem:[#allocation2 + $0x58] sm:$0xff]
          %v2301 = vld [vmem:[#allocation2 + $0x60] sm:$0xff]
          %v2302 = vld [vmem:[#allocation2 + $0x68] sm:$0xff]
          %v2303 = vld [vmem:[#allocation2 + $0x70] sm:$0xff]
          %v2304 = vld [vmem:[#allocation2 + $0x78] sm:$0xff]
          %v2305 = vld [vmem:[#allocation2 + $0x80] sm:$0xff]
          %v2306 = vld [vmem:[#allocation2 + $0x88] sm:$0xff]
          %v2307 = vld [vmem:[#allocation2 + $0x90] sm:$0xff]
          %v2308 = vld [vmem:[#allocation2 + $0x98] sm:$0xff]
          %v2309 = vld [vmem:[#allocation2 + $0xa0] sm:$0xff]
          %v2310 = vld [vmem:[#allocation2 + $0xa8] sm:$0xff]
          %v2311 = vld [vmem:[#allocation2 + $0xb0] sm:$0xff]
          %v2312 = vld [vmem:[#allocation2 + $0xb8] sm:$0xff]
          %v2313 = vld [vmem:[#allocation2 + $0xc0] sm:$0xff]
          %v2314 = vld [vmem:[#allocation2 + $0xc8] sm:$0xff]
          %v2315 = vld [vmem:[#allocation2 + $0xd0] sm:$0xff]
          %v2316 = vld [vmem:[#allocation2 + $0xd8] sm:$0xff]
          %v2317 = vld [vmem:[#allocation2 + $0xe0] sm:$0xff]
          %v2318 = vld [vmem:[#allocation2 + $0xe8] sm:$0xff]
          %v2319 = vld [vmem:[#allocation2 + $0xf0] sm:$0xff]
          %v2320 = vld [vmem:[#allocation2 + $0xf8] sm:$0xff]
          %v2321 = vld [vmem:[%s2] sm:$0x1]
          %v2323 = vlaneseq
          %v2324 = vshrl.u32 %v2323, 7
          %v2325 = vsub.s32 0, %v2324
          %v2326 = vrot.slane %v2321, %v2325
          %v2328 = vadd.f32 %v2289, %v2326
          %v2329 = vadd.f32 %v2290, %v2326
          %v2330 = vadd.f32 %v2291, %v2326
          %v2331 = vadd.f32 %v2292, %v2326
          %v2332 = vadd.f32 %v2293, %v2326
          %v2333 = vadd.f32 %v2294, %v2326
          %v2334 = vadd.f32 %v2295, %v2326
          %v2335 = vadd.f32 %v2296, %v2326
          %v2336 = vadd.f32 %v2297, %v2326
          %v2337 = vadd.f32 %v2298, %v2326
          %v2338 = vadd.f32 %v2299, %v2326
          %v2339 = vadd.f32 %v2300, %v2326
          %v2340 = vadd.f32 %v2301, %v2326
          %v2341 = vadd.f32 %v2302, %v2326
          %v2342 = vadd.f32 %v2303, %v2326
          %v2343 = vadd.f32 %v2304, %v2326
          %v2344 = vadd.f32 %v2305, %v2326
          %v2345 = vadd.f32 %v2306, %v2326
          %v2346 = vadd.f32 %v2307, %v2326
          %v2347 = vadd.f32 %v2308, %v2326
          %v2348 = vadd.f32 %v2309, %v2326
          %v2349 = vadd.f32 %v2310, %v2326
          %v2350 = vadd.f32 %v2311, %v2326
          %v2351 = vadd.f32 %v2312, %v2326
          %v2352 = vadd.f32 %v2313, %v2326
          %v2353 = vadd.f32 %v2314, %v2326
          %v2354 = vadd.f32 %v2315, %v2326
          %v2355 = vadd.f32 %v2316, %v2326
          %v2356 = vadd.f32 %v2317, %v2326
          %v2357 = vadd.f32 %v2318, %v2326
          %v2358 = vadd.f32 %v2319, %v2326
          %v2359 = vadd.f32 %v2320, %v2326
          %2360 = vst [vmem:[%s220] sm:$0xff] %v2328
          %2361 = vst [vmem:[%s220 + $0x8] sm:$0xff] %v2329
          %2362 = vst [vmem:[%s220 + $0x10] sm:$0xff] %v2330
          %2363 = vst [vmem:[%s220 + $0x18] sm:$0xff] %v2331
          %2364 = vst [vmem:[%s220 + $0x20] sm:$0xff] %v2332
          %2365 = vst [vmem:[%s220 + $0x28] sm:$0xff] %v2333
          %2366 = vst [vmem:[%s220 + $0x30] sm:$0xff] %v2334
          %2367 = vst [vmem:[%s220 + $0x38] sm:$0xff] %v2335
          %2368 = vst [vmem:[%s220 + $0x40] sm:$0xff] %v2336
          %2369 = vst [vmem:[%s220 + $0x48] sm:$0xff] %v2337
          %2370 = vst [vmem:[%s220 + $0x50] sm:$0xff] %v2338
          %2371 = vst [vmem:[%s220 + $0x58] sm:$0xff] %v2339
          %2372 = vst [vmem:[%s220 + $0x60] sm:$0xff] %v2340
          %2373 = vst [vmem:[%s220 + $0x68] sm:$0xff] %v2341
          %2374 = vst [vmem:[%s220 + $0x70] sm:$0xff] %v2342
          %2375 = vst [vmem:[%s220 + $0x78] sm:$0xff] %v2343
          %2376 = vst [vmem:[%s220 + $0x80] sm:$0xff] %v2344
          %2377 = vst [vmem:[%s220 + $0x88] sm:$0xff] %v2345
          %2378 = vst [vmem:[%s220 + $0x90] sm:$0xff] %v2346
          %2379 = vst [vmem:[%s220 + $0x98] sm:$0xff] %v2347
          %2380 = vst [vmem:[%s220 + $0xa0] sm:$0xff] %v2348
          %2381 = vst [vmem:[%s220 + $0xa8] sm:$0xff] %v2349
          %2382 = vst [vmem:[%s220 + $0xb0] sm:$0xff] %v2350
          %2383 = vst [vmem:[%s220 + $0xb8] sm:$0xff] %v2351
          %2384 = vst [vmem:[%s220 + $0xc0] sm:$0xff] %v2352
          %2385 = vst [vmem:[%s220 + $0xc8] sm:$0xff] %v2353
          %2386 = vst [vmem:[%s220 + $0xd0] sm:$0xff] %v2354
          %2387 = vst [vmem:[%s220 + $0xd8] sm:$0xff] %v2355
          %2388 = vst [vmem:[%s220 + $0xe0] sm:$0xff] %v2356
          %2389 = vst [vmem:[%s220 + $0xe8] sm:$0xff] %v2357
          %2390 = vst [vmem:[%s220 + $0xf0] sm:$0xff] %v2358
          %2391 = vst [vmem:[%s220 + $0xf8] sm:$0xff] %v2359
        $region48: #{tpu_custom_call.1} parent=31 // pred_fallthru
          _
        %s2392 = sand.u32 %s111, 1
        %s2393 = scalar_lea.sflag [#allocation5], %s2392
        %s2394 = sand.u32 %s111, 1
        %s2395 = smul.addr %s2394, 256
        %s2396 = scalar_lea.vmem [#allocation8], %s2395
        // Predicated region
        $region49: #{tpu_custom_call.1} parent=31 // pred_check
          %p2397 = pneg %p121
        $region50: #{tpu_custom_call.1} parent=31 // pred_check_branch
          %2399 = sbr.rel (%p2397) target = $region52
        $region51: #{tpu_custom_call.1} parent=31 // pred_region
          %s2400 = smul.u32 32, %s25
          %s2402 = ssub.s32 4096, 4096
          %2403 = vsyncadd %s2393, %s2402
          %s2404 = smul.addr %s2400, 128
          %s2405 = scalar_lea.hbm %s3, %s2404
          %s2406 = sshll.u32 %s2396, 4
          %s2407 = int_to_ptr.vmem [resolvable:$true] %s2406
          %2412 = dma.vmem_to_hbm [thread:$0]  %s2407, 4096, %s2405, %s2393, 128, 128, 8
        $region52: #{tpu_custom_call.1} parent=31 // pred_fallthru
          _
      $region32: #{tpu_custom_call.1} parent=5 // pred_fallthru
        _
      %p2413 = scmp.le.s32.totalorder 2, %s16
      // Predicated region
      $region53: #{tpu_custom_call.1} parent=5 // pred_check
        %p2414 = pneg %p2413
      $region54: #{tpu_custom_call.1} parent=5 // pred_check_branch
        %2416 = sbr.rel (%p2414) target = $region56
      $region55: #{tpu_custom_call.1} parent=5 // pred_region
        %s2417 = ssub.s32 %s16, 2
        // Predicated region
        $region57: #{tpu_custom_call.1} parent=55 // pred_check
          %p2418 = pneg %p127
        $region58: #{tpu_custom_call.1} parent=55 // pred_check_branch
          %2420 = sbr.rel (%p2418) target = $region60
        $region59: #{tpu_custom_call.1} parent=55 // pred_region
          %s2421 = sand.u32 %s112, 1
          %s2422 = scalar_lea.sflag [#allocation5], %s2421
          %s2423 = sand.u32 %s112, 1
          %s2424 = smul.addr %s2423, 256
          %s2425 = scalar_lea.vmem [#allocation8], %s2424
          %2426 = dma.done %s2422, 4096
        $region60: #{tpu_custom_call.1} parent=55 // pred_fallthru
          _
      $region56: #{tpu_custom_call.1} parent=5 // pred_fallthru
        _
    $region6: #{tpu_custom_call.1} parent=1 // loop_footer
      %s20 = sadd.s32 1, %s16
    $region7: #{tpu_custom_call.1} parent=1 // loop_footer_branch
      %15 = sbr.rel target = $region3
    $region8: #{tpu_custom_call.1} parent=1 // loop_exit
      _
    %2427 = vsyncpa [#allocation4], 1
    %s2428 = scalar_lea.sflag [#allocation4], 1
    %2429 = vsyncpa %s2428, 1
    %2430 = vsyncpa [#allocation7], 1
    %2431 = vsyncpa [#allocation5], 1
    %s2432 = scalar_lea.sflag [#allocation5], 1
    %2433 = vsyncpa %s2432, 1

</llo_original>
